<compile_context>
chip_gen: v5e
topology: v5e:2x2
jax: 0.10.0
libtpu: 0.0.40
codegen_flags: <defaults>
</compile_context>

<pallas_src>
import jax
import jax.numpy as jnp
from jax import lax
from jax.experimental import pallas as pl
from jax.experimental.pallas import tpu as pltpu
import numpy as np


def _make_mp_kernel(Ho, Wo, Cin, Ch):
    N = Ho * Wo

    def silu(v):
        return v * jax.nn.sigmoid(v)

    def kernel(x_ref, w1_ref, s1_ref, b1_ref, w2_ref, s2_ref, b2_ref,
               w3_ref, s3_ref, b3_ref, o_ref):
        # x_ref: (Ho, 2, Wo, 2*Cin) folded image of one batch element
        #        x_ref[i, p, j, q*Cin + c] == x[2i+p, 2j+q, c]
        # o_ref: (N, 2*Ch) fused output (branch0 channels 0:Ch, branch1 Ch:2Ch)
        x = x_ref[...]

        # four 2x2-parity planes, flattened row-major (n = i*Wo + j) to (N, Cin)
        x00 = x[:, 0, :, :Cin].reshape(N, Cin)     # rows 2i,   cols 2j
        x01 = x[:, 0, :, Cin:].reshape(N, Cin)     # rows 2i,   cols 2j+1
        x10 = x[:, 1, :, :Cin].reshape(N, Cin)     # rows 2i+1, cols 2j
        x11 = x[:, 1, :, Cin:].reshape(N, Cin)     # rows 2i+1, cols 2j+1

        # ---------------- branch 0: maxpool(2,2) -> cbs1 (1x1 conv, BN, SiLU) --
        pool = jnp.maximum(jnp.maximum(x00, x01), jnp.maximum(x10, x11))
        y0 = jnp.dot(pool, w1_ref[...], preferred_element_type=jnp.float32)
        y0 = silu(y0 * s1_ref[...] + b1_ref[...])                       # (N, Ch)

        # ---------------- branch 1: cbs2 (1x1 conv, BN, SiLU) on full res ------
        w2 = w2_ref[...]
        s2 = s2_ref[...]
        b2 = b2_ref[...]

        def cbs2(xp):
            z = jnp.dot(xp, w2, preferred_element_type=jnp.float32)
            return silu(z * s2 + b2)

        t00 = cbs2(x00)   # t00[i*Wo+j] = t[2i,   2j  ]
        t01 = cbs2(x01)   # t01[i*Wo+j] = t[2i,   2j+1]
        t10 = cbs2(x10)   # t10[i*Wo+j] = t[2i+1, 2j  ]
        t11 = cbs2(x11)   # t11[i*Wo+j] = t[2i+1, 2j+1]

        # ---------------- cbs3: 3x3 conv, stride 2, pad 1, BN, SiLU ------------
        # patch A[dy][dx][i*Wo+j] = t[2i+dy-1, 2j+dx-1]  (zero-padded)
        zrow = jnp.zeros((Wo, Ch), jnp.float32)
        zone = jnp.zeros((1, Ch), jnp.float32)
        col0 = (lax.broadcasted_iota(jnp.int32, (N, Ch), 0) % Wo) == 0

        def shift_h(z):   # out[i*Wo+j] = z[(i-1)*Wo+j], zero for i == 0
            return jnp.concatenate([zrow, z[:N - Wo]], axis=0)

        def shift_w(z):   # out[i*Wo+j] = z[i*Wo+j-1],  zero for j == 0
            s = jnp.concatenate([zone, z[:N - 1]], axis=0)
            return jnp.where(col0, 0.0, s)

        a11 = t00
        a12 = t01
        a10 = shift_w(t01)
        a21 = t10
        a22 = t11
        a20 = shift_w(t11)
        a01 = shift_h(t10)
        a02 = shift_h(t11)
        a00 = shift_h(a20)

        patches = (a00, a01, a02, a10, a11, a12, a20, a21, a22)
        acc = jnp.zeros((N, Ch), jnp.float32)
        for k in range(9):                         # static unroll: 9 MXU matmuls
            acc = acc + jnp.dot(patches[k], w3_ref[k],
                                preferred_element_type=jnp.float32)
        y1 = silu(acc * s3_ref[...] + b3_ref[...])                      # (N, Ch)

        # fused channel concat -> single lane-dense (N, 2*Ch) store
        o_ref[...] = jnp.concatenate([y0, y1], axis=1).astype(o_ref.dtype)

    return kernel


def mp_forward_pallas(x, params):
    """x: [B, H, W, Cin] f32 (NHWC). Returns [B, H//2, W//2, 2*Ch] (NHWC)."""
    B, H, W, Cin = x.shape
    Ch = params["w1"].shape[1]
    assert H % 2 == 0 and W % 2 == 0
    Ho, Wo = H // 2, W // 2
    N = Ho * Wo
    assert Wo % 8 == 0, "Wo must be a multiple of 8 so in-kernel reshapes are layout-free"

    # free space-to-depth view: x_f[b, i, p, j, q*Cin + c] = x[b, 2i+p, 2j+q, c]
    x_f = x.reshape(B, Ho, 2, Wo, 2 * Cin)

    def vec2(v):                       # (Ch,) -> (1, Ch) for 2-D in-kernel broadcast
        return v.reshape(1, -1)

    def full(shape):                   # whole array resident in VMEM every step
        return pl.BlockSpec(shape, lambda b, _s=shape: (0,) * len(_s))

    kernel = _make_mp_kernel(Ho, Wo, Cin, Ch)

    out = pl.pallas_call(
        kernel,
        out_shape=jax.ShapeDtypeStruct((B, N, 2 * Ch), x.dtype),
        grid=(B,),
        in_specs=[
            pl.BlockSpec((pl.Squeezed(), Ho, 2, Wo, 2 * Cin),
                         lambda b: (b, 0, 0, 0, 0)),
            full((Cin, Ch)), full((1, Ch)), full((1, Ch)),      # cbs1
            full((Cin, Ch)), full((1, Ch)), full((1, Ch)),      # cbs2
            full((9, Ch, Ch)), full((1, Ch)), full((1, Ch)),    # cbs3
        ],
        out_specs=pl.BlockSpec((pl.Squeezed(), N, 2 * Ch), lambda b: (b, 0, 0)),
        compiler_params=pltpu.CompilerParams(
            dimension_semantics=("parallel",)),
    )(x_f,
      params["w1"], vec2(params["s1"]), vec2(params["b1"]),
      params["w2"], vec2(params["s2"]), vec2(params["b2"]),
      params["w3"], vec2(params["s3"]), vec2(params["b3"]))

    return out.reshape(B, Ho, Wo, 2 * Ch)


# ----------------------------- pure-JAX reference -----------------------------
def _fold_bn(gamma, beta, mean, var, eps=1e-3):
    scale = gamma / jnp.sqrt(var + eps)
    return scale, beta - mean * scale


def mp_forward_reference(x, params):
    Cin = x.shape[-1]
    Ch = params["w1"].shape[1]

    def cbs(y, w_hwio, s, b, stride, pad):
        y = lax.conv_general_dilated(
            y, w_hwio, window_strides=(stride, stride),
            padding=((pad, pad), (pad, pad)),
            dimension_numbers=("NHWC", "HWIO", "NHWC"),
            precision=lax.Precision.HIGHEST)
        y = y * s + b
        return y * jax.nn.sigmoid(y)

    x0 = lax.reduce_window(x, -jnp.inf, lax.max,
                           (1, 2, 2, 1), (1, 2, 2, 1), "VALID")
    x0 = cbs(x0, params["w1"].reshape(1, 1, Cin, Ch), params["s1"], params["b1"], 1, 0)
    x1 = cbs(x, params["w2"].reshape(1, 1, Cin, Ch), params["s2"], params["b2"], 1, 0)
    x1 = cbs(x1, params["w3"].reshape(3, 3, Ch, Ch), params["s3"], params["b3"], 2, 1)
    return jnp.concatenate([x0, x1], axis=-1)


if __name__ == "__main__":
    # mp(in_=64, out_=128) on a [2, 16, 16, 64] NHWC input
    B, H, W = 2, 16, 16
    in_, out_ = 64, 128
    Cin, Ch = in_, out_ // 2           # fused output channels = 2*Ch = 128 (lane-dense)

    key = jax.random.PRNGKey(0)
    ks = jax.random.split(key, 8)

    x = jax.random.normal(ks[0], (B, H, W, Cin), dtype=jnp.float32)

    def bn_params(k):
        kg, kb, km, kv = jax.random.split(k, 4)
        gamma = 1.0 + 0.1 * jax.random.normal(kg, (Ch,), jnp.float32)
        beta = 0.1 * jax.random.normal(kb, (Ch,), jnp.float32)
        mean = 0.1 * jax.random.normal(km, (Ch,), jnp.float32)
        var = 1.0 + 0.1 * jax.random.uniform(kv, (Ch,), jnp.float32)
        return _fold_bn(gamma, beta, mean, var, eps=1e-3)

    s1, b1 = bn_params(ks[1])
    s2, b2 = bn_params(ks[2])
    s3, b3 = bn_params(ks[3])

    params = {
        "w1": 0.1 * jax.random.normal(ks[4], (Cin, Ch), jnp.float32),   # cbs1 1x1
        "w2": 0.1 * jax.random.normal(ks[5], (Cin, Ch), jnp.float32),   # cbs2 1x1
        # w3[dy*3+dx, ci, co]  <->  torch conv weight[co, ci, dy, dx]
        "w3": 0.1 * jax.random.normal(ks[6], (9, Ch, Ch), jnp.float32),  # cbs3 3x3
        "s1": s1, "b1": b1, "s2": s2, "b2": b2, "s3": s3, "b3": b3,
    }

    out = mp_forward_pallas(x, params)
    out = jax.block_until_ready(out)
    assert out.shape == (B, H // 2, W // 2, out_), out.shape

    ref = mp_forward_reference(x, params)
    np.testing.assert_allclose(np.asarray(out), np.asarray(ref), rtol=2e-3, atol=2e-3)

    print("KERNEL_OK")
</pallas_src>

<mosaic_0001>
module attributes {stable_mosaic.version = 11 : i64} {
  func.func @kernel(%arg0: i32, %arg1: memref<1x8x2x8x128xf32, #tpu.memory_space<vmem>>, %arg2: memref<64x64xf32, #tpu.memory_space<vmem>>, %arg3: memref<1x64xf32, #tpu.memory_space<vmem>>, %arg4: memref<1x64xf32, #tpu.memory_space<vmem>>, %arg5: memref<64x64xf32, #tpu.memory_space<vmem>>, %arg6: memref<1x64xf32, #tpu.memory_space<vmem>>, %arg7: memref<1x64xf32, #tpu.memory_space<vmem>>, %arg8: memref<9x64x64xf32, #tpu.memory_space<vmem>>, %arg9: memref<1x64xf32, #tpu.memory_space<vmem>>, %arg10: memref<1x64xf32, #tpu.memory_space<vmem>>, %arg11: memref<1x64x128xf32, #tpu.memory_space<vmem>>) attributes {dimension_semantics = [#tpu.dimension_semantics<parallel>], iteration_bounds = array<i64: 2>, scalar_prefetch = 0 : i64, scratch_operands = 0 : i64, tpu.core_type = #tpu.core_type<tc>, window_params = [{transform_indices = @transform_0, window_bounds = array<i64: 1, 8, 2, 8, 128>}, {pipeline_mode = #tpu.pipeline_mode<synchronous>, transform_indices = @transform_1, window_bounds = array<i64: 64, 64>}, {pipeline_mode = #tpu.pipeline_mode<synchronous>, transform_indices = @transform_2, window_bounds = array<i64: 1, 64>}, {pipeline_mode = #tpu.pipeline_mode<synchronous>, transform_indices = @transform_3, window_bounds = array<i64: 1, 64>}, {pipeline_mode = #tpu.pipeline_mode<synchronous>, transform_indices = @transform_4, window_bounds = array<i64: 64, 64>}, {pipeline_mode = #tpu.pipeline_mode<synchronous>, transform_indices = @transform_5, window_bounds = array<i64: 1, 64>}, {pipeline_mode = #tpu.pipeline_mode<synchronous>, transform_indices = @transform_6, window_bounds = array<i64: 1, 64>}, {pipeline_mode = #tpu.pipeline_mode<synchronous>, transform_indices = @transform_7, window_bounds = array<i64: 9, 64, 64>}, {pipeline_mode = #tpu.pipeline_mode<synchronous>, transform_indices = @transform_8, window_bounds = array<i64: 1, 64>}, {pipeline_mode = #tpu.pipeline_mode<synchronous>, transform_indices = @transform_9, window_bounds = array<i64: 1, 64>}, {transform_indices = @transform_10, window_bounds = array<i64: 1, 64, 128>}]} {
    %c0 = arith.constant 0 : index
    %c0_0 = arith.constant 0 : index
    %c0_1 = arith.constant 0 : index
    %c0_2 = arith.constant 0 : index
    %c0_3 = arith.constant 0 : index
    %0 = vector.load %arg1[%c0, %c0_0, %c0_1, %c0_2, %c0_3] : memref<1x8x2x8x128xf32, #tpu.memory_space<vmem>>, vector<1x8x2x8x128xf32>
    %1 = vector.shape_cast %0 : vector<1x8x2x8x128xf32> to vector<8x2x8x128xf32>
    %2 = vector.extract_strided_slice %1 {offsets = [0, 0, 0, 0], sizes = [8, 1, 8, 64], strides = [1, 1, 1, 1]} : vector<8x2x8x128xf32> to vector<8x1x8x64xf32>
    %3 = vector.shape_cast %2 : vector<8x1x8x64xf32> to vector<8x8x64xf32>
    %4 = vector.shape_cast %3 : vector<8x8x64xf32> to vector<64x64xf32>
    %5 = vector.extract_strided_slice %1 {offsets = [0, 0, 0, 64], sizes = [8, 1, 8, 64], strides = [1, 1, 1, 1]} : vector<8x2x8x128xf32> to vector<8x1x8x64xf32>
    %6 = vector.shape_cast %5 : vector<8x1x8x64xf32> to vector<8x8x64xf32>
    %7 = vector.shape_cast %6 : vector<8x8x64xf32> to vector<64x64xf32>
    %8 = vector.extract_strided_slice %1 {offsets = [0, 1, 0, 0], sizes = [8, 1, 8, 64], strides = [1, 1, 1, 1]} : vector<8x2x8x128xf32> to vector<8x1x8x64xf32>
    %9 = vector.shape_cast %8 : vector<8x1x8x64xf32> to vector<8x8x64xf32>
    %10 = vector.shape_cast %9 : vector<8x8x64xf32> to vector<64x64xf32>
    %11 = vector.extract_strided_slice %1 {offsets = [0, 1, 0, 64], sizes = [8, 1, 8, 64], strides = [1, 1, 1, 1]} : vector<8x2x8x128xf32> to vector<8x1x8x64xf32>
    %12 = vector.shape_cast %11 : vector<8x1x8x64xf32> to vector<8x8x64xf32>
    %13 = vector.shape_cast %12 : vector<8x8x64xf32> to vector<64x64xf32>
    %14 = arith.maximumf %4, %7 : vector<64x64xf32>
    %15 = arith.maximumf %10, %13 : vector<64x64xf32>
    %16 = arith.maximumf %14, %15 : vector<64x64xf32>
    %c0_4 = arith.constant 0 : index
    %c0_5 = arith.constant 0 : index
    %17 = vector.load %arg2[%c0_4, %c0_5] : memref<64x64xf32, #tpu.memory_space<vmem>>, vector<64x64xf32>
    %cst = arith.constant dense<0.000000e+00> : vector<64x64xf32>
    %18 = tpu.matmul %16, %17, %cst {dimension_numbers = #tpu.dot_dimension_numbers<[1], [0], [0], [1], [0, 0, 1, 1], [], []>} : vector<64x64xf32>, vector<64x64xf32>, vector<64x64xf32> -> vector<64x64xf32>
    %c0_6 = arith.constant 0 : index
    %c0_7 = arith.constant 0 : index
    %19 = vector.load %arg3[%c0_6, %c0_7] : memref<1x64xf32, #tpu.memory_space<vmem>>, vector<1x64xf32>
    %20 = vector.broadcast %19 : vector<1x64xf32> to vector<64x64xf32>
    %21 = arith.mulf %18, %20 : vector<64x64xf32>
    %c0_8 = arith.constant 0 : index
    %c0_9 = arith.constant 0 : index
    %22 = vector.load %arg4[%c0_8, %c0_9] : memref<1x64xf32, #tpu.memory_space<vmem>>, vector<1x64xf32>
    %23 = vector.broadcast %22 : vector<1x64xf32> to vector<64x64xf32>
    %24 = arith.addf %21, %23 : vector<64x64xf32>
    %25 = arith.negf %24 : vector<64x64xf32>
    %26 = math.exp %25 : vector<64x64xf32>
    %cst_10 = arith.constant 1.000000e+00 : f32
    %27 = vector.broadcast %cst_10 : f32 to vector<64x64xf32>
    %28 = arith.addf %27, %26 : vector<64x64xf32>
    %29 = arith.divf %27, %28 : vector<64x64xf32>
    %30 = arith.mulf %24, %29 : vector<64x64xf32>
    %c0_11 = arith.constant 0 : index
    %c0_12 = arith.constant 0 : index
    %31 = vector.load %arg5[%c0_11, %c0_12] : memref<64x64xf32, #tpu.memory_space<vmem>>, vector<64x64xf32>
    %c0_13 = arith.constant 0 : index
    %c0_14 = arith.constant 0 : index
    %32 = vector.load %arg6[%c0_13, %c0_14] : memref<1x64xf32, #tpu.memory_space<vmem>>, vector<1x64xf32>
    %c0_15 = arith.constant 0 : index
    %c0_16 = arith.constant 0 : index
    %33 = vector.load %arg7[%c0_15, %c0_16] : memref<1x64xf32, #tpu.memory_space<vmem>>, vector<1x64xf32>
    %cst_17 = arith.constant dense<0.000000e+00> : vector<64x64xf32>
    %34 = tpu.matmul %4, %31, %cst_17 {dimension_numbers = #tpu.dot_dimension_numbers<[1], [0], [0], [1], [0, 0, 1, 1], [], []>} : vector<64x64xf32>, vector<64x64xf32>, vector<64x64xf32> -> vector<64x64xf32>
    %35 = vector.broadcast %32 : vector<1x64xf32> to vector<64x64xf32>
    %36 = arith.mulf %34, %35 : vector<64x64xf32>
    %37 = vector.broadcast %33 : vector<1x64xf32> to vector<64x64xf32>
    %38 = arith.addf %36, %37 : vector<64x64xf32>
    %39 = arith.negf %38 : vector<64x64xf32>
    %40 = math.exp %39 : vector<64x64xf32>
    %cst_18 = arith.constant 1.000000e+00 : f32
    %41 = vector.broadcast %cst_18 : f32 to vector<64x64xf32>
    %42 = arith.addf %41, %40 : vector<64x64xf32>
    %43 = arith.divf %41, %42 : vector<64x64xf32>
    %44 = arith.mulf %38, %43 : vector<64x64xf32>
    %cst_19 = arith.constant dense<0.000000e+00> : vector<64x64xf32>
    %45 = tpu.matmul %7, %31, %cst_19 {dimension_numbers = #tpu.dot_dimension_numbers<[1], [0], [0], [1], [0, 0, 1, 1], [], []>} : vector<64x64xf32>, vector<64x64xf32>, vector<64x64xf32> -> vector<64x64xf32>
    %46 = vector.broadcast %32 : vector<1x64xf32> to vector<64x64xf32>
    %47 = arith.mulf %45, %46 : vector<64x64xf32>
    %48 = vector.broadcast %33 : vector<1x64xf32> to vector<64x64xf32>
    %49 = arith.addf %47, %48 : vector<64x64xf32>
    %50 = arith.negf %49 : vector<64x64xf32>
    %51 = math.exp %50 : vector<64x64xf32>
    %cst_20 = arith.constant 1.000000e+00 : f32
    %52 = vector.broadcast %cst_20 : f32 to vector<64x64xf32>
    %53 = arith.addf %52, %51 : vector<64x64xf32>
    %54 = arith.divf %52, %53 : vector<64x64xf32>
    %55 = arith.mulf %49, %54 : vector<64x64xf32>
    %cst_21 = arith.constant dense<0.000000e+00> : vector<64x64xf32>
    %56 = tpu.matmul %10, %31, %cst_21 {dimension_numbers = #tpu.dot_dimension_numbers<[1], [0], [0], [1], [0, 0, 1, 1], [], []>} : vector<64x64xf32>, vector<64x64xf32>, vector<64x64xf32> -> vector<64x64xf32>
    %57 = vector.broadcast %32 : vector<1x64xf32> to vector<64x64xf32>
    %58 = arith.mulf %56, %57 : vector<64x64xf32>
    %59 = vector.broadcast %33 : vector<1x64xf32> to vector<64x64xf32>
    %60 = arith.addf %58, %59 : vector<64x64xf32>
    %61 = arith.negf %60 : vector<64x64xf32>
    %62 = math.exp %61 : vector<64x64xf32>
    %cst_22 = arith.constant 1.000000e+00 : f32
    %63 = vector.broadcast %cst_22 : f32 to vector<64x64xf32>
    %64 = arith.addf %63, %62 : vector<64x64xf32>
    %65 = arith.divf %63, %64 : vector<64x64xf32>
    %66 = arith.mulf %60, %65 : vector<64x64xf32>
    %cst_23 = arith.constant dense<0.000000e+00> : vector<64x64xf32>
    %67 = tpu.matmul %13, %31, %cst_23 {dimension_numbers = #tpu.dot_dimension_numbers<[1], [0], [0], [1], [0, 0, 1, 1], [], []>} : vector<64x64xf32>, vector<64x64xf32>, vector<64x64xf32> -> vector<64x64xf32>
    %68 = vector.broadcast %32 : vector<1x64xf32> to vector<64x64xf32>
    %69 = arith.mulf %67, %68 : vector<64x64xf32>
    %70 = vector.broadcast %33 : vector<1x64xf32> to vector<64x64xf32>
    %71 = arith.addf %69, %70 : vector<64x64xf32>
    %72 = arith.negf %71 : vector<64x64xf32>
    %73 = math.exp %72 : vector<64x64xf32>
    %cst_24 = arith.constant 1.000000e+00 : f32
    %74 = vector.broadcast %cst_24 : f32 to vector<64x64xf32>
    %75 = arith.addf %74, %73 : vector<64x64xf32>
    %76 = arith.divf %74, %75 : vector<64x64xf32>
    %77 = arith.mulf %71, %76 : vector<64x64xf32>
    %cst_25 = arith.constant 0.000000e+00 : f32
    %78 = vector.broadcast %cst_25 : f32 to vector<8x64xf32>
    %cst_26 = arith.constant 0.000000e+00 : f32
    %79 = vector.broadcast %cst_26 : f32 to vector<1x64xf32>
    %80 = tpu.iota {dimensions = array<i32: 0>} : vector<64x64xi32>
    %c8_i32 = arith.constant 8 : i32
    %c0_i32 = arith.constant 0 : i32
    %81 = arith.cmpi eq, %c8_i32, %c0_i32 : i32
    %c1_i32 = arith.constant 1 : i32
    %82 = arith.select %81, %c1_i32, %c8_i32 : i32
    %83 = vector.broadcast %82 : i32 to vector<64x64xi32>
    %84 = arith.remsi %80, %83 : vector<64x64xi32>
    %c0_i32_27 = arith.constant 0 : i32
    %85 = vector.broadcast %c0_i32_27 : i32 to vector<64x64xi32>
    %86 = arith.cmpi ne, %84, %85 : vector<64x64xi32>
    %c0_i32_28 = arith.constant 0 : i32
    %87 = vector.broadcast %c0_i32_28 : i32 to vector<64x64xi32>
    %88 = arith.cmpi slt, %84, %87 : vector<64x64xi32>
    %c0_i32_29 = arith.constant 0 : i32
    %89 = arith.cmpi slt, %82, %c0_i32_29 : i32
    %90 = vector.broadcast %89 : i1 to vector<64x64xi1>
    %91 = vector.broadcast %90 : vector<64x64xi1> to vector<64x64xi1>
    %92 = arith.xori %88, %91 : vector<64x64xi1>
    %93 = arith.andi %92, %86 : vector<64x64xi1>
    %94 = vector.broadcast %82 : i32 to vector<64x64xi32>
    %95 = arith.addi %84, %94 : vector<64x64xi32>
    %96 = arith.select %93, %95, %84 : vector<64x64xi1>, vector<64x64xi32>
    %c0_i32_30 = arith.constant 0 : i32
    %97 = vector.broadcast %c0_i32_30 : i32 to vector<64x64xi32>
    %98 = arith.cmpi eq, %96, %97 : vector<64x64xi32>
    %99 = vector.extract_strided_slice %55 {offsets = [0, 0], sizes = [63, 64], strides = [1, 1]} : vector<64x64xf32> to vector<63x64xf32>
    %100 = tpu.concatenate %79, %99 in 0 : vector<1x64xf32>, vector<63x64xf32> -> vector<64x64xf32>
    %cst_31 = arith.constant 0.000000e+00 : f32
    %101 = vector.broadcast %cst_31 : f32 to vector<64x64xf32>
    %102 = arith.select %98, %101, %100 : vector<64x64xi1>, vector<64x64xf32>
    %103 = vector.extract_strided_slice %77 {offsets = [0, 0], sizes = [63, 64], strides = [1, 1]} : vector<64x64xf32> to vector<63x64xf32>
    %104 = tpu.concatenate %79, %103 in 0 : vector<1x64xf32>, vector<63x64xf32> -> vector<64x64xf32>
    %cst_32 = arith.constant 0.000000e+00 : f32
    %105 = vector.broadcast %cst_32 : f32 to vector<64x64xf32>
    %106 = arith.select %98, %105, %104 : vector<64x64xi1>, vector<64x64xf32>
    %107 = vector.extract_strided_slice %66 {offsets = [0, 0], sizes = [56, 64], strides = [1, 1]} : vector<64x64xf32> to vector<56x64xf32>
    %108 = tpu.concatenate %78, %107 in 0 : vector<8x64xf32>, vector<56x64xf32> -> vector<64x64xf32>
    %109 = vector.extract_strided_slice %77 {offsets = [0, 0], sizes = [56, 64], strides = [1, 1]} : vector<64x64xf32> to vector<56x64xf32>
    %110 = tpu.concatenate %78, %109 in 0 : vector<8x64xf32>, vector<56x64xf32> -> vector<64x64xf32>
    %111 = vector.extract_strided_slice %106 {offsets = [0, 0], sizes = [56, 64], strides = [1, 1]} : vector<64x64xf32> to vector<56x64xf32>
    %112 = tpu.concatenate %78, %111 in 0 : vector<8x64xf32>, vector<56x64xf32> -> vector<64x64xf32>
    %cst_33 = arith.constant 0.000000e+00 : f32
    %113 = vector.broadcast %cst_33 : f32 to vector<64x64xf32>
    %c0_34 = arith.constant 0 : index
    %c0_35 = arith.constant 0 : index
    %c0_36 = arith.constant 0 : index
    %114 = vector.load %arg8[%c0_34, %c0_35, %c0_36] : memref<9x64x64xf32, #tpu.memory_space<vmem>>, vector<1x64x64xf32>
    %115 = vector.shape_cast %114 : vector<1x64x64xf32> to vector<64x64xf32>
    %cst_37 = arith.constant dense<0.000000e+00> : vector<64x64xf32>
    %116 = tpu.matmul %112, %115, %cst_37 {dimension_numbers = #tpu.dot_dimension_numbers<[1], [0], [0], [1], [0, 0, 1, 1], [], []>} : vector<64x64xf32>, vector<64x64xf32>, vector<64x64xf32> -> vector<64x64xf32>
    %117 = arith.addf %113, %116 : vector<64x64xf32>
    %c1 = arith.constant 1 : index
    %c0_38 = arith.constant 0 : index
    %c0_39 = arith.constant 0 : index
    %118 = vector.load %arg8[%c1, %c0_38, %c0_39] : memref<9x64x64xf32, #tpu.memory_space<vmem>>, vector<1x64x64xf32>
    %119 = vector.shape_cast %118 : vector<1x64x64xf32> to vector<64x64xf32>
    %cst_40 = arith.constant dense<0.000000e+00> : vector<64x64xf32>
    %120 = tpu.matmul %108, %119, %cst_40 {dimension_numbers = #tpu.dot_dimension_numbers<[1], [0], [0], [1], [0, 0, 1, 1], [], []>} : vector<64x64xf32>, vector<64x64xf32>, vector<64x64xf32> -> vector<64x64xf32>
    %121 = arith.addf %117, %120 : vector<64x64xf32>
    %c2 = arith.constant 2 : index
    %c0_41 = arith.constant 0 : index
    %c0_42 = arith.constant 0 : index
    %122 = vector.load %arg8[%c2, %c0_41, %c0_42] : memref<9x64x64xf32, #tpu.memory_space<vmem>>, vector<1x64x64xf32>
    %123 = vector.shape_cast %122 : vector<1x64x64xf32> to vector<64x64xf32>
    %cst_43 = arith.constant dense<0.000000e+00> : vector<64x64xf32>
    %124 = tpu.matmul %110, %123, %cst_43 {dimension_numbers = #tpu.dot_dimension_numbers<[1], [0], [0], [1], [0, 0, 1, 1], [], []>} : vector<64x64xf32>, vector<64x64xf32>, vector<64x64xf32> -> vector<64x64xf32>
    %125 = arith.addf %121, %124 : vector<64x64xf32>
    %c3 = arith.constant 3 : index
    %c0_44 = arith.constant 0 : index
    %c0_45 = arith.constant 0 : index
    %126 = vector.load %arg8[%c3, %c0_44, %c0_45] : memref<9x64x64xf32, #tpu.memory_space<vmem>>, vector<1x64x64xf32>
    %127 = vector.shape_cast %126 : vector<1x64x64xf32> to vector<64x64xf32>
    %cst_46 = arith.constant dense<0.000000e+00> : vector<64x64xf32>
    %128 = tpu.matmul %102, %127, %cst_46 {dimension_numbers = #tpu.dot_dimension_numbers<[1], [0], [0], [1], [0, 0, 1, 1], [], []>} : vector<64x64xf32>, vector<64x64xf32>, vector<64x64xf32> -> vector<64x64xf32>
    %129 = arith.addf %125, %128 : vector<64x64xf32>
    %c4 = arith.constant 4 : index
    %c0_47 = arith.constant 0 : index
    %c0_48 = arith.constant 0 : index
    %130 = vector.load %arg8[%c4, %c0_47, %c0_48] : memref<9x64x64xf32, #tpu.memory_space<vmem>>, vector<1x64x64xf32>
    %131 = vector.shape_cast %130 : vector<1x64x64xf32> to vector<64x64xf32>
    %cst_49 = arith.constant dense<0.000000e+00> : vector<64x64xf32>
    %132 = tpu.matmul %44, %131, %cst_49 {dimension_numbers = #tpu.dot_dimension_numbers<[1], [0], [0], [1], [0, 0, 1, 1], [], []>} : vector<64x64xf32>, vector<64x64xf32>, vector<64x64xf32> -> vector<64x64xf32>
    %133 = arith.addf %129, %132 : vector<64x64xf32>
    %c5 = arith.constant 5 : index
    %c0_50 = arith.constant 0 : index
    %c0_51 = arith.constant 0 : index
    %134 = vector.load %arg8[%c5, %c0_50, %c0_51] : memref<9x64x64xf32, #tpu.memory_space<vmem>>, vector<1x64x64xf32>
    %135 = vector.shape_cast %134 : vector<1x64x64xf32> to vector<64x64xf32>
    %cst_52 = arith.constant dense<0.000000e+00> : vector<64x64xf32>
    %136 = tpu.matmul %55, %135, %cst_52 {dimension_numbers = #tpu.dot_dimension_numbers<[1], [0], [0], [1], [0, 0, 1, 1], [], []>} : vector<64x64xf32>, vector<64x64xf32>, vector<64x64xf32> -> vector<64x64xf32>
    %137 = arith.addf %133, %136 : vector<64x64xf32>
    %c6 = arith.constant 6 : index
    %c0_53 = arith.constant 0 : index
    %c0_54 = arith.constant 0 : index
    %138 = vector.load %arg8[%c6, %c0_53, %c0_54] : memref<9x64x64xf32, #tpu.memory_space<vmem>>, vector<1x64x64xf32>
    %139 = vector.shape_cast %138 : vector<1x64x64xf32> to vector<64x64xf32>
    %cst_55 = arith.constant dense<0.000000e+00> : vector<64x64xf32>
    %140 = tpu.matmul %106, %139, %cst_55 {dimension_numbers = #tpu.dot_dimension_numbers<[1], [0], [0], [1], [0, 0, 1, 1], [], []>} : vector<64x64xf32>, vector<64x64xf32>, vector<64x64xf32> -> vector<64x64xf32>
    %141 = arith.addf %137, %140 : vector<64x64xf32>
    %c7 = arith.constant 7 : index
    %c0_56 = arith.constant 0 : index
    %c0_57 = arith.constant 0 : index
    %142 = vector.load %arg8[%c7, %c0_56, %c0_57] : memref<9x64x64xf32, #tpu.memory_space<vmem>>, vector<1x64x64xf32>
    %143 = vector.shape_cast %142 : vector<1x64x64xf32> to vector<64x64xf32>
    %cst_58 = arith.constant dense<0.000000e+00> : vector<64x64xf32>
    %144 = tpu.matmul %66, %143, %cst_58 {dimension_numbers = #tpu.dot_dimension_numbers<[1], [0], [0], [1], [0, 0, 1, 1], [], []>} : vector<64x64xf32>, vector<64x64xf32>, vector<64x64xf32> -> vector<64x64xf32>
    %145 = arith.addf %141, %144 : vector<64x64xf32>
    %c8 = arith.constant 8 : index
    %c0_59 = arith.constant 0 : index
    %c0_60 = arith.constant 0 : index
    %146 = vector.load %arg8[%c8, %c0_59, %c0_60] : memref<9x64x64xf32, #tpu.memory_space<vmem>>, vector<1x64x64xf32>
    %147 = vector.shape_cast %146 : vector<1x64x64xf32> to vector<64x64xf32>
    %cst_61 = arith.constant dense<0.000000e+00> : vector<64x64xf32>
    %148 = tpu.matmul %77, %147, %cst_61 {dimension_numbers = #tpu.dot_dimension_numbers<[1], [0], [0], [1], [0, 0, 1, 1], [], []>} : vector<64x64xf32>, vector<64x64xf32>, vector<64x64xf32> -> vector<64x64xf32>
    %149 = arith.addf %145, %148 : vector<64x64xf32>
    %c0_62 = arith.constant 0 : index
    %c0_63 = arith.constant 0 : index
    %150 = vector.load %arg9[%c0_62, %c0_63] : memref<1x64xf32, #tpu.memory_space<vmem>>, vector<1x64xf32>
    %151 = vector.broadcast %150 : vector<1x64xf32> to vector<64x64xf32>
    %152 = arith.mulf %149, %151 : vector<64x64xf32>
    %c0_64 = arith.constant 0 : index
    %c0_65 = arith.constant 0 : index
    %153 = vector.load %arg10[%c0_64, %c0_65] : memref<1x64xf32, #tpu.memory_space<vmem>>, vector<1x64xf32>
    %154 = vector.broadcast %153 : vector<1x64xf32> to vector<64x64xf32>
    %155 = arith.addf %152, %154 : vector<64x64xf32>
    %156 = arith.negf %155 : vector<64x64xf32>
    %157 = math.exp %156 : vector<64x64xf32>
    %cst_66 = arith.constant 1.000000e+00 : f32
    %158 = vector.broadcast %cst_66 : f32 to vector<64x64xf32>
    %159 = arith.addf %158, %157 : vector<64x64xf32>
    %160 = arith.divf %158, %159 : vector<64x64xf32>
    %161 = arith.mulf %155, %160 : vector<64x64xf32>
    %162 = tpu.concatenate %30, %161 in 1 : vector<64x64xf32>, vector<64x64xf32> -> vector<64x128xf32>
    %c0_67 = arith.constant 0 : index
    %c0_68 = arith.constant 0 : index
    %c0_69 = arith.constant 0 : index
    %163 = vector.load %arg11[%c0_67, %c0_68, %c0_69] : memref<1x64x128xf32, #tpu.memory_space<vmem>>, vector<1x64x128xf32>
    %164 = vector.shape_cast %163 : vector<1x64x128xf32> to vector<64x128xf32>
    %165 = vector.shape_cast %162 : vector<64x128xf32> to vector<1x64x128xf32>
    tpu.vector_store %arg11[%c0_67, %c0_68, %c0_69], %165 {strides = array<i32>} : memref<1x64x128xf32, #tpu.memory_space<vmem>>, vector<1x64x128xf32>,
    return
  }
  func.func @transform_0(%arg0: i32) -> (i32, i32, i32, i32, i32) {
    %c0_i32 = arith.constant 0 : i32
    %c0_i32_0 = arith.constant 0 : i32
    %c0_i32_1 = arith.constant 0 : i32
    %c0_i32_2 = arith.constant 0 : i32
    %c0_i32_3 = arith.constant 0 : i32
    return %arg0, %c0_i32, %c0_i32_0, %c0_i32_1, %c0_i32_2 : i32, i32, i32, i32, i32
  }
  func.func @transform_1(%arg0: i32) -> (i32, i32) {
    %c0_i32 = arith.constant 0 : i32
    %c0_i32_0 = arith.constant 0 : i32
    %c0_i32_1 = arith.constant 0 : i32
    return %c0_i32, %c0_i32_0 : i32, i32
  }
  func.func @transform_2(%arg0: i32) -> (i32, i32) {
    %c0_i32 = arith.constant 0 : i32
    %c0_i32_0 = arith.constant 0 : i32
    %c0_i32_1 = arith.constant 0 : i32
    return %c0_i32, %c0_i32_0 : i32, i32
  }
  func.func @transform_3(%arg0: i32) -> (i32, i32) {
    %c0_i32 = arith.constant 0 : i32
    %c0_i32_0 = arith.constant 0 : i32
    %c0_i32_1 = arith.constant 0 : i32
    return %c0_i32, %c0_i32_0 : i32, i32
  }
  func.func @transform_4(%arg0: i32) -> (i32, i32) {
    %c0_i32 = arith.constant 0 : i32
    %c0_i32_0 = arith.constant 0 : i32
    %c0_i32_1 = arith.constant 0 : i32
    return %c0_i32, %c0_i32_0 : i32, i32
  }
  func.func @transform_5(%arg0: i32) -> (i32, i32) {
    %c0_i32 = arith.constant 0 : i32
    %c0_i32_0 = arith.constant 0 : i32
    %c0_i32_1 = arith.constant 0 : i32
    return %c0_i32, %c0_i32_0 : i32, i32
  }
  func.func @transform_6(%arg0: i32) -> (i32, i32) {
    %c0_i32 = arith.constant 0 : i32
    %c0_i32_0 = arith.constant 0 : i32
    %c0_i32_1 = arith.constant 0 : i32
    return %c0_i32, %c0_i32_0 : i32, i32
  }
  func.func @transform_7(%arg0: i32) -> (i32, i32, i32) {
    %c0_i32 = arith.constant 0 : i32
    %c0_i32_0 = arith.constant 0 : i32
    %c0_i32_1 = arith.constant 0 : i32
    %c0_i32_2 = arith.constant 0 : i32
    return %c0_i32, %c0_i32_0, %c0_i32_1 : i32, i32, i32
  }
  func.func @transform_8(%arg0: i32) -> (i32, i32) {
    %c0_i32 = arith.constant 0 : i32
    %c0_i32_0 = arith.constant 0 : i32
    %c0_i32_1 = arith.constant 0 : i32
    return %c0_i32, %c0_i32_0 : i32, i32
  }
  func.func @transform_9(%arg0: i32) -> (i32, i32) {
    %c0_i32 = arith.constant 0 : i32
    %c0_i32_0 = arith.constant 0 : i32
    %c0_i32_1 = arith.constant 0 : i32
    return %c0_i32, %c0_i32_0 : i32, i32
  }
  func.func @transform_10(%arg0: i32) -> (i32, i32, i32) {
    %c0_i32 = arith.constant 0 : i32
    %c0_i32_0 = arith.constant 0 : i32
    %c0_i32_1 = arith.constant 0 : i32
    return %arg0, %c0_i32, %c0_i32_0 : i32, i32, i32
  }
}

</mosaic_0001>

<llo_original>
// kernel: tpu_custom_call.1
$region0: #{tpu_custom_call.1}
  #allocation0 [shape = 'u32[]', space=smem, size = 0x4, offset = 0x4, fixed_abs, tag = 'smem constant byte address 0x4 - core index']
  #allocation1 [shape = 'u32[72,128]{1,0:T(1,128)}', space=vmem, size = 0x9000, scoped, tag = 'internal scratch']
  %s0 = inlined_call_operand.hbm [shape: f32[2,8,2,8,128], index: 0, kind: input, shape index: {}]
  %s1 = inlined_call_operand.hbm [shape: f32[64,64], index: 1, kind: input, shape index: {}]
  %s2 = inlined_call_operand.vmem [shape: f32[1,64], index: 2, kind: input, shape index: {}]
  %s3 = inlined_call_operand.vmem [shape: f32[1,64], index: 3, kind: input, shape index: {}]
  %s4 = inlined_call_operand.hbm [shape: f32[64,64], index: 4, kind: input, shape index: {}]
  %s5 = inlined_call_operand.vmem [shape: f32[1,64], index: 5, kind: input, shape index: {}]
  %s6 = inlined_call_operand.vmem [shape: f32[1,64], index: 6, kind: input, shape index: {}]
  %s7 = inlined_call_operand.hbm [shape: f32[9,64,64], index: 7, kind: input, shape index: {}]
  %s8 = inlined_call_operand.vmem [shape: f32[1,64], index: 8, kind: input, shape index: {}]
  %s9 = inlined_call_operand.vmem [shape: f32[1,64], index: 9, kind: input, shape index: {}]
  %s10 = inlined_call_operand.hbm [shape: f32[2,64,128], index: 10, kind: output, shape index: {}]
  %s11 = sld [smem:[#allocation0]]
  $region89: #{tpu_custom_call.1} parent=0
    _
  %s13 = ssub.s32 1, %s11
  %s14 = scalar_select 0, %s13, %s11
  $region1: #{tpu_custom_call.1} parent=0
    #allocation2 [shape = 'u8[131072]{0}', space=vmem, size = 0x20000, scoped, tag = 'input window, operand 0']
    #allocation3 [shape = 's32[2]{0}', space=sflag, size = 0x8, scoped, tag = 'scoped memory for tpu_custom_call.1']
    #allocation4 [shape = 's32[2]{0}', space=sflag, size = 0x8, scoped, tag = 'scoped memory for tpu_custom_call.1']
    #allocation5 [shape = 'u8[32768]{0}', space=vmem, size = 0x8000, scoped, tag = 'input window, operand 1, single buffered']
    #allocation6 [shape = 's32[1]{0}', space=sflag, size = 0x4, scoped, tag = 'scoped memory for tpu_custom_call.1']
    #allocation7 [shape = 'u8[32768]{0}', space=vmem, size = 0x8000, scoped, tag = 'input window, operand 4, single buffered']
    #allocation8 [shape = 'u8[294912]{0}', space=vmem, size = 0x48000, scoped, tag = 'input window, operand 7, single buffered']
    #allocation9 [shape = 's32[1]{0}', space=sflag, size = 0x4, scoped, tag = 'scoped memory for tpu_custom_call.1']
    #allocation10 [shape = 'u8[65536]{0}', space=vmem, size = 0x10000, scoped, tag = 'output window, operand 0']
    %15 = vsyncpa [#allocation3], 0
    %s16 = scalar_lea.sflag [#allocation3], 1
    %17 = vsyncpa %s16, 0
    %18 = vsyncpa [#allocation6], 0
    %19 = vsyncpa [#allocation9], 0
    %20 = vsyncpa [#allocation4], 0
    %s21 = scalar_lea.sflag [#allocation4], 1
    %22 = vsyncpa %s21, 0
    loop: start=0, step=1, limit=4
    $region2: #{tpu_custom_call.1} parent=1 // loop_pre_header
      _
    $region3: #{tpu_custom_call.1} parent=1 // loop_header
      %s24 = sphi 0, %s28
      %p25 = scmp.ge.s32.totalorder %s24, 4
      %s34 = sphi 0, %s36
      %s37 = sphi 0, %s34
      %s38 = sphi 0, %s37
      %s54 = sphi 0, %s38
      %s58 = sphi 0, %s58
      %s60 = sphi 0, %s58
      %s61 = sphi 0, %s60
      %s75 = sphi 0, %s61
      %s79 = sphi 0, %s79
      %s81 = sphi 0, %s79
      %s82 = sphi 0, %s81
      %s96 = sphi 0, %s82
      %s100 = sphi 0, %s100
      %s102 = sphi 0, %s100
      %s103 = sphi 0, %s102
      %s117 = sphi 0, %s103
      %s121 = sphi 0, %s121
      %s123 = sphi 0, %s121
      %s124 = sphi 0, %s123
      %s138 = sphi 0, %s124
      %s142 = sphi 0, %s142
      %s144 = sphi 0, %s142
      %s145 = sphi 0, %s144
      %s159 = sphi 0, %s145
      %s163 = sphi 0, %s163
      %s165 = sphi 0, %s163
      %s166 = sphi 0, %s165
      %s180 = sphi 0, %s166
      %s184 = sphi 0, %s184
      %s186 = sphi 0, %s184
      %s187 = sphi 0, %s186
      %s201 = sphi 0, %s187
      %s205 = sphi 0, %s205
      %s207 = sphi 0, %s205
      %s208 = sphi 0, %s207
      %s222 = sphi 0, %s208
      %s226 = sphi 0, %s226
      %s228 = sphi 0, %s226
      %s229 = sphi 0, %s228
      %s243 = sphi 0, %s229
      %s249 = sphi 0, %s251
      %s252 = sphi 0, %s249
      %s253 = sphi 0, %s252
      %s269 = sphi 0, %s253
    $region4: #{tpu_custom_call.1} parent=1 // loop_header_branch
      %27 = sbr.rel (%p25) target = $region8
    $region5: #{tpu_custom_call.1} parent=1 // loop_body
      %s29 = ssub.s32 %s24, 1
      %s30 = ssub.s32 %s24, 2
      %s31 = sadd.s32 %s24, 1
      %s32 = ssub.s32 %s24, %s31
      %p33 = scmp.eq.s32.totalorder %s32, 0
      %s35 = sadd.s32 %s34, 1
      %s36 = scalar_select %p33, %s34, %s35
      %p39 = pneg %p33
      %p40 = scmp.eq.s32.totalorder %s24, 1
      %p41 = por %p39, %p40
      %p42 = scmp.ne.s32.totalorder %s34, %s37
      %p43 = scmp.eq.s32.totalorder %s24, 0
      %p44 = por %p42, %p43
      %p45 = scmp.ne.s32.totalorder %s34, %s37
      %p46 = scmp.eq.s32.totalorder %s29, 1
      %p47 = por %p45, %p46
      %p48 = scmp.ne.s32.totalorder %s37, %s38
      %p49 = scmp.eq.s32.totalorder %s29, 0
      %p50 = por %p48, %p49
      %p51 = scmp.ne.s32.totalorder %s37, %s38
      %p52 = scmp.eq.s32.totalorder %s30, 1
      %p53 = por %p51, %p52
      %p55 = scmp.ne.s32.totalorder %s38, %s54
      %p56 = scmp.eq.s32.totalorder %s30, 0
      %p57 = por %p55, %p56
      %s59 = sadd.s32 %s58, 1
      %p62 = scmp.eq.s32.totalorder %s24, 1
      %p63 = scmp.ne.s32.totalorder %s58, %s60
      %p64 = scmp.eq.s32.totalorder %s24, 0
      %p65 = por %p63, %p64
      %p66 = scmp.ne.s32.totalorder %s58, %s60
      %p67 = scmp.eq.s32.totalorder %s29, 1
      %p68 = por %p66, %p67
      %p69 = scmp.ne.s32.totalorder %s60, %s61
      %p70 = scmp.eq.s32.totalorder %s29, 0
      %p71 = por %p69, %p70
      %p72 = scmp.ne.s32.totalorder %s60, %s61
      %p73 = scmp.eq.s32.totalorder %s30, 1
      %p74 = por %p72, %p73
      %p76 = scmp.ne.s32.totalorder %s61, %s75
      %p77 = scmp.eq.s32.totalorder %s30, 0
      %p78 = por %p76, %p77
      %s80 = sadd.s32 %s79, 1
      %p83 = scmp.eq.s32.totalorder %s24, 1
      %p84 = scmp.ne.s32.totalorder %s79, %s81
      %p85 = scmp.eq.s32.totalorder %s24, 0
      %p86 = por %p84, %p85
      %p87 = scmp.ne.s32.totalorder %s79, %s81
      %p88 = scmp.eq.s32.totalorder %s29, 1
      %p89 = por %p87, %p88
      %p90 = scmp.ne.s32.totalorder %s81, %s82
      %p91 = scmp.eq.s32.totalorder %s29, 0
      %p92 = por %p90, %p91
      %p93 = scmp.ne.s32.totalorder %s81, %s82
      %p94 = scmp.eq.s32.totalorder %s30, 1
      %p95 = por %p93, %p94
      %p97 = scmp.ne.s32.totalorder %s82, %s96
      %p98 = scmp.eq.s32.totalorder %s30, 0
      %p99 = por %p97, %p98
      %s101 = sadd.s32 %s100, 1
      %p104 = scmp.eq.s32.totalorder %s24, 1
      %p105 = scmp.ne.s32.totalorder %s100, %s102
      %p106 = scmp.eq.s32.totalorder %s24, 0
      %p107 = por %p105, %p106
      %p108 = scmp.ne.s32.totalorder %s100, %s102
      %p109 = scmp.eq.s32.totalorder %s29, 1
      %p110 = por %p108, %p109
      %p111 = scmp.ne.s32.totalorder %s102, %s103
      %p112 = scmp.eq.s32.totalorder %s29, 0
      %p113 = por %p111, %p112
      %p114 = scmp.ne.s32.totalorder %s102, %s103
      %p115 = scmp.eq.s32.totalorder %s30, 1
      %p116 = por %p114, %p115
      %p118 = scmp.ne.s32.totalorder %s103, %s117
      %p119 = scmp.eq.s32.totalorder %s30, 0
      %p120 = por %p118, %p119
      %s122 = sadd.s32 %s121, 1
      %p125 = scmp.eq.s32.totalorder %s24, 1
      %p126 = scmp.ne.s32.totalorder %s121, %s123
      %p127 = scmp.eq.s32.totalorder %s24, 0
      %p128 = por %p126, %p127
      %p129 = scmp.ne.s32.totalorder %s121, %s123
      %p130 = scmp.eq.s32.totalorder %s29, 1
      %p131 = por %p129, %p130
      %p132 = scmp.ne.s32.totalorder %s123, %s124
      %p133 = scmp.eq.s32.totalorder %s29, 0
      %p134 = por %p132, %p133
      %p135 = scmp.ne.s32.totalorder %s123, %s124
      %p136 = scmp.eq.s32.totalorder %s30, 1
      %p137 = por %p135, %p136
      %p139 = scmp.ne.s32.totalorder %s124, %s138
      %p140 = scmp.eq.s32.totalorder %s30, 0
      %p141 = por %p139, %p140
      %s143 = sadd.s32 %s142, 1
      %p146 = scmp.eq.s32.totalorder %s24, 1
      %p147 = scmp.ne.s32.totalorder %s142, %s144
      %p148 = scmp.eq.s32.totalorder %s24, 0
      %p149 = por %p147, %p148
      %p150 = scmp.ne.s32.totalorder %s142, %s144
      %p151 = scmp.eq.s32.totalorder %s29, 1
      %p152 = por %p150, %p151
      %p153 = scmp.ne.s32.totalorder %s144, %s145
      %p154 = scmp.eq.s32.totalorder %s29, 0
      %p155 = por %p153, %p154
      %p156 = scmp.ne.s32.totalorder %s144, %s145
      %p157 = scmp.eq.s32.totalorder %s30, 1
      %p158 = por %p156, %p157
      %p160 = scmp.ne.s32.totalorder %s145, %s159
      %p161 = scmp.eq.s32.totalorder %s30, 0
      %p162 = por %p160, %p161
      %s164 = sadd.s32 %s163, 1
      %p167 = scmp.eq.s32.totalorder %s24, 1
      %p168 = scmp.ne.s32.totalorder %s163, %s165
      %p169 = scmp.eq.s32.totalorder %s24, 0
      %p170 = por %p168, %p169
      %p171 = scmp.ne.s32.totalorder %s163, %s165
      %p172 = scmp.eq.s32.totalorder %s29, 1
      %p173 = por %p171, %p172
      %p174 = scmp.ne.s32.totalorder %s165, %s166
      %p175 = scmp.eq.s32.totalorder %s29, 0
      %p176 = por %p174, %p175
      %p177 = scmp.ne.s32.totalorder %s165, %s166
      %p178 = scmp.eq.s32.totalorder %s30, 1
      %p179 = por %p177, %p178
      %p181 = scmp.ne.s32.totalorder %s166, %s180
      %p182 = scmp.eq.s32.totalorder %s30, 0
      %p183 = por %p181, %p182
      %s185 = sadd.s32 %s184, 1
      %p188 = scmp.eq.s32.totalorder %s24, 1
      %p189 = scmp.ne.s32.totalorder %s184, %s186
      %p190 = scmp.eq.s32.totalorder %s24, 0
      %p191 = por %p189, %p190
      %p192 = scmp.ne.s32.totalorder %s184, %s186
      %p193 = scmp.eq.s32.totalorder %s29, 1
      %p194 = por %p192, %p193
      %p195 = scmp.ne.s32.totalorder %s186, %s187
      %p196 = scmp.eq.s32.totalorder %s29, 0
      %p197 = por %p195, %p196
      %p198 = scmp.ne.s32.totalorder %s186, %s187
      %p199 = scmp.eq.s32.totalorder %s30, 1
      %p200 = por %p198, %p199
      %p202 = scmp.ne.s32.totalorder %s187, %s201
      %p203 = scmp.eq.s32.totalorder %s30, 0
      %p204 = por %p202, %p203
      %s206 = sadd.s32 %s205, 1
      %p209 = scmp.eq.s32.totalorder %s24, 1
      %p210 = scmp.ne.s32.totalorder %s205, %s207
      %p211 = scmp.eq.s32.totalorder %s24, 0
      %p212 = por %p210, %p211
      %p213 = scmp.ne.s32.totalorder %s205, %s207
      %p214 = scmp.eq.s32.totalorder %s29, 1
      %p215 = por %p213, %p214
      %p216 = scmp.ne.s32.totalorder %s207, %s208
      %p217 = scmp.eq.s32.totalorder %s29, 0
      %p218 = por %p216, %p217
      %p219 = scmp.ne.s32.totalorder %s207, %s208
      %p220 = scmp.eq.s32.totalorder %s30, 1
      %p221 = por %p219, %p220
      %p223 = scmp.ne.s32.totalorder %s208, %s222
      %p224 = scmp.eq.s32.totalorder %s30, 0
      %p225 = por %p223, %p224
      %s227 = sadd.s32 %s226, 1
      %p230 = scmp.eq.s32.totalorder %s24, 1
      %p231 = scmp.ne.s32.totalorder %s226, %s228
      %p232 = scmp.eq.s32.totalorder %s24, 0
      %p233 = por %p231, %p232
      %p234 = scmp.ne.s32.totalorder %s226, %s228
      %p235 = scmp.eq.s32.totalorder %s29, 1
      %p236 = por %p234, %p235
      %p237 = scmp.ne.s32.totalorder %s228, %s229
      %p238 = scmp.eq.s32.totalorder %s29, 0
      %p239 = por %p237, %p238
      %p240 = scmp.ne.s32.totalorder %s228, %s229
      %p241 = scmp.eq.s32.totalorder %s30, 1
      %p242 = por %p240, %p241
      %p244 = scmp.ne.s32.totalorder %s229, %s243
      %p245 = scmp.eq.s32.totalorder %s30, 0
      %p246 = por %p244, %p245
      %s247 = ssub.s32 %s24, %s31
      %p248 = scmp.eq.s32.totalorder %s247, 0
      %s250 = sadd.s32 %s249, 1
      %s251 = scalar_select %p248, %s249, %s250
      %p254 = pneg %p248
      %p255 = scmp.eq.s32.totalorder %s24, 1
      %p256 = por %p254, %p255
      %p257 = scmp.ne.s32.totalorder %s249, %s252
      %p258 = scmp.eq.s32.totalorder %s24, 0
      %p259 = por %p257, %p258
      %p260 = scmp.ne.s32.totalorder %s249, %s252
      %p261 = scmp.eq.s32.totalorder %s29, 1
      %p262 = por %p260, %p261
      %p263 = scmp.ne.s32.totalorder %s252, %s253
      %p264 = scmp.eq.s32.totalorder %s29, 0
      %p265 = por %p263, %p264
      %p266 = scmp.ne.s32.totalorder %s252, %s253
      %p267 = scmp.eq.s32.totalorder %s30, 1
      %p268 = por %p266, %p267
      %p270 = scmp.ne.s32.totalorder %s253, %s269
      %p271 = scmp.eq.s32.totalorder %s30, 0
      %p272 = por %p270, %p271
      %p273 = scmp.le.s32.totalorder 1, %s24
      %p274 = scmp.lt.s32.totalorder %s24, 3
      %p275 = pnand %p273, %p274
      %p276 = pneg %p275
      // Predicated region
      $region9: #{tpu_custom_call.1} parent=5 // pred_check
        _
      $region10: #{tpu_custom_call.1} parent=5 // pred_check_branch
        %278 = sbr.rel (%p275) target = $region12
      $region11: #{tpu_custom_call.1} parent=5 // pred_region
        %s279 = ssub.s32 %s24, 1
        // Predicated region
        $region13: #{tpu_custom_call.1} parent=11 // pred_check
          %p280 = pneg %p71
        $region14: #{tpu_custom_call.1} parent=11 // pred_check_branch
          %282 = sbr.rel (%p280) target = $region16
        $region15: #{tpu_custom_call.1} parent=11 // pred_region
          %284 = vsyncadd [#allocation6], 0
          %s285 = sshll.u32 %s1, 4
          %s286 = int_to_ptr.hbm [resolvable:$true] %s285
          %s287 = sshll.u32 [#allocation5], 4
          %s288 = int_to_ptr.vmem [resolvable:$true] %s287
          %293 = dma.hbm_to_vmem [thread:$0]  %s286, 1024, %s288, [#allocation6], 128, 128, 8
        $region16: #{tpu_custom_call.1} parent=11 // pred_fallthru
          _
        // Predicated region
        $region17: #{tpu_custom_call.1} parent=11 // pred_check
          %p294 = pneg %p92
        $region18: #{tpu_custom_call.1} parent=11 // pred_check_branch
          %296 = sbr.rel (%p294) target = $region20
        $region19: #{tpu_custom_call.1} parent=11 // pred_region
          _
        $region20: #{tpu_custom_call.1} parent=11 // pred_fallthru
          _
        // Predicated region
        $region21: #{tpu_custom_call.1} parent=11 // pred_check
          %p297 = pneg %p113
        $region22: #{tpu_custom_call.1} parent=11 // pred_check_branch
          %299 = sbr.rel (%p297) target = $region24
        $region23: #{tpu_custom_call.1} parent=11 // pred_region
          _
        $region24: #{tpu_custom_call.1} parent=11 // pred_fallthru
          _
        // Predicated region
        $region25: #{tpu_custom_call.1} parent=11 // pred_check
          %p300 = pneg %p134
        $region26: #{tpu_custom_call.1} parent=11 // pred_check_branch
          %302 = sbr.rel (%p300) target = $region28
        $region27: #{tpu_custom_call.1} parent=11 // pred_region
          %304 = vsyncadd [#allocation6], 0
          %s305 = sshll.u32 %s4, 4
          %s306 = int_to_ptr.hbm [resolvable:$true] %s305
          %s307 = sshll.u32 [#allocation7], 4
          %s308 = int_to_ptr.vmem [resolvable:$true] %s307
          %313 = dma.hbm_to_vmem [thread:$0]  %s306, 1024, %s308, [#allocation6], 128, 128, 8
        $region28: #{tpu_custom_call.1} parent=11 // pred_fallthru
          _
        // Predicated region
        $region29: #{tpu_custom_call.1} parent=11 // pred_check
          %p314 = pneg %p155
        $region30: #{tpu_custom_call.1} parent=11 // pred_check_branch
          %316 = sbr.rel (%p314) target = $region32
        $region31: #{tpu_custom_call.1} parent=11 // pred_region
          _
        $region32: #{tpu_custom_call.1} parent=11 // pred_fallthru
          _
        // Predicated region
        $region33: #{tpu_custom_call.1} parent=11 // pred_check
          %p317 = pneg %p176
        $region34: #{tpu_custom_call.1} parent=11 // pred_check_branch
          %319 = sbr.rel (%p317) target = $region36
        $region35: #{tpu_custom_call.1} parent=11 // pred_region
          _
        $region36: #{tpu_custom_call.1} parent=11 // pred_fallthru
          _
        // Predicated region
        $region37: #{tpu_custom_call.1} parent=11 // pred_check
          %p320 = pneg %p197
        $region38: #{tpu_custom_call.1} parent=11 // pred_check_branch
          %322 = sbr.rel (%p320) target = $region40
        $region39: #{tpu_custom_call.1} parent=11 // pred_region
          %324 = vsyncadd [#allocation9], 0
          %s325 = sshll.u32 %s7, 4
          %s326 = int_to_ptr.hbm [resolvable:$true] %s325
          %s327 = sshll.u32 [#allocation8], 4
          %s328 = int_to_ptr.vmem [resolvable:$true] %s327
          %333 = dma.hbm_to_vmem [thread:$0]  %s326, 9216, %s328, [#allocation9], 128, 128, 8
        $region40: #{tpu_custom_call.1} parent=11 // pred_fallthru
          _
        // Predicated region
        $region41: #{tpu_custom_call.1} parent=11 // pred_check
          %p334 = pneg %p218
        $region42: #{tpu_custom_call.1} parent=11 // pred_check_branch
          %336 = sbr.rel (%p334) target = $region44
        $region43: #{tpu_custom_call.1} parent=11 // pred_region
          _
        $region44: #{tpu_custom_call.1} parent=11 // pred_fallthru
          _
        // Predicated region
        $region45: #{tpu_custom_call.1} parent=11 // pred_check
          %p337 = pneg %p239
        $region46: #{tpu_custom_call.1} parent=11 // pred_check_branch
          %339 = sbr.rel (%p337) target = $region48
        $region47: #{tpu_custom_call.1} parent=11 // pred_region
          _
        $region48: #{tpu_custom_call.1} parent=11 // pred_fallthru
          _
      $region12: #{tpu_custom_call.1} parent=5 // pred_fallthru
        _
      %p340 = scmp.lt.s32.totalorder %s24, 2
      // Predicated region
      $region49: #{tpu_custom_call.1} parent=5 // pred_check
        %p341 = pneg %p340
      $region50: #{tpu_custom_call.1} parent=5 // pred_check_branch
        %343 = sbr.rel (%p341) target = $region52
      $region51: #{tpu_custom_call.1} parent=5 // pred_region
        // Predicated region
        $region53: #{tpu_custom_call.1} parent=51 // pred_check
          %p344 = pneg %p44
        $region54: #{tpu_custom_call.1} parent=51 // pred_check_branch
          %346 = sbr.rel (%p344) target = $region56
        $region55: #{tpu_custom_call.1} parent=51 // pred_region
          %s347 = sand.u32 %s34, 1
          %s348 = scalar_lea.sflag [#allocation3], %s347
          %s349 = sand.u32 %s34, 1
          %s350 = smul.addr %s349, 128
          %s351 = scalar_lea.vmem [#allocation2], %s350
          %353 = vsyncadd %s348, 0
          %s354 = smul.addr %s24, 16
          %s355 = smul.addr %s354, 8
          %s356 = scalar_lea.hbm %s0, %s355
          %s357 = sshll.u32 %s356, 4
          %s358 = int_to_ptr.hbm [resolvable:$true] %s357
          %s359 = sshll.u32 %s351, 4
          %s360 = int_to_ptr.vmem [resolvable:$true] %s359
          %365 = dma.hbm_to_vmem [thread:$0]  %s358, 2048, %s360, %s348, 128, 128, 8
        $region56: #{tpu_custom_call.1} parent=51 // pred_fallthru
          _
      $region52: #{tpu_custom_call.1} parent=5 // pred_fallthru
        _
      %p366 = scmp.le.s32.totalorder 1, %s24
      %p367 = scmp.lt.s32.totalorder %s24, 3
      %p368 = pnand %p366, %p367
      %p369 = pneg %p368
      // Predicated region
      $region57: #{tpu_custom_call.1} parent=5 // pred_check
        _
      $region58: #{tpu_custom_call.1} parent=5 // pred_check_branch
        %371 = sbr.rel (%p368) target = $region60
      $region59: #{tpu_custom_call.1} parent=5 // pred_region
        %s372 = ssub.s32 %s24, 1
        %s373 = sand.u32 %s37, 1
        %s374 = scalar_lea.sflag [#allocation3], %s373
        %s375 = sand.u32 %s37, 1
        %s376 = smul.addr %s375, 128
        %s377 = scalar_lea.vmem [#allocation2], %s376
        // Predicated region
        $region61: #{tpu_custom_call.1} parent=59 // pred_check
          %p378 = pneg %p50
        $region62: #{tpu_custom_call.1} parent=59 // pred_check_branch
          %380 = sbr.rel (%p378) target = $region64
        $region63: #{tpu_custom_call.1} parent=59 // pred_region
          %382 = dma.done %s374, 2048
        $region64: #{tpu_custom_call.1} parent=59 // pred_fallthru
          _
        // Predicated region
        $region65: #{tpu_custom_call.1} parent=59 // pred_check
          %p383 = pneg %p71
        $region66: #{tpu_custom_call.1} parent=59 // pred_check_branch
          %385 = sbr.rel (%p383) target = $region68
        $region67: #{tpu_custom_call.1} parent=59 // pred_region
          %387 = dma.done [#allocation6], 1024
        $region68: #{tpu_custom_call.1} parent=59 // pred_fallthru
          _
        // Predicated region
        $region69: #{tpu_custom_call.1} parent=59 // pred_check
          %p388 = pneg %p134
        $region70: #{tpu_custom_call.1} parent=59 // pred_check_branch
          %390 = sbr.rel (%p388) target = $region72
        $region71: #{tpu_custom_call.1} parent=59 // pred_region
          %392 = dma.done [#allocation6], 1024
        $region72: #{tpu_custom_call.1} parent=59 // pred_fallthru
          _
        // Predicated region
        $region73: #{tpu_custom_call.1} parent=59 // pred_check
          %p393 = pneg %p197
        $region74: #{tpu_custom_call.1} parent=59 // pred_check_branch
          %395 = sbr.rel (%p393) target = $region76
        $region75: #{tpu_custom_call.1} parent=59 // pred_region
          %397 = dma.done [#allocation9], 9216
        $region76: #{tpu_custom_call.1} parent=59 // pred_fallthru
          _
        %s398 = sand.u32 %s37, 1
        %s399 = scalar_lea.sflag [#allocation3], %s398
        %s400 = sand.u32 %s37, 1
        %s401 = smul.addr %s400, 128
        %s402 = scalar_lea.vmem [#allocation2], %s401
        %p403 = pneg %p50
        %p404 = pneg %p47
        %p405 = pneg %p71
        %p406 = pneg %p68
        %p407 = pneg %p92
        %p408 = pneg %p89
        %p409 = pneg %p113
        %p410 = pneg %p110
        %p411 = pneg %p134
        %p412 = pneg %p131
        %p413 = pneg %p155
        %p414 = pneg %p152
        %p415 = pneg %p176
        %p416 = pneg %p173
        %p417 = pneg %p197
        %p418 = pneg %p194
        %p419 = pneg %p218
        %p420 = pneg %p215
        %p421 = pneg %p239
        %p422 = pneg %p236
        %p423 = pneg %p265
        %p424 = pneg %p262
        %s425 = sand.u32 %s252, 1
        %s426 = scalar_lea.sflag [#allocation4], %s425
        %s427 = sand.u32 %s252, 1
        %s428 = smul.addr %s427, 64
        %s429 = scalar_lea.vmem [#allocation10], %s428
        %v430 = vld [vmem:[%s377] sm:$0xff]
        %v431 = vld [vmem:[%s377 + $0x8] sm:$0xff]
        %v432 = vld [vmem:[%s377 + $0x10] sm:$0xff]
        %v433 = vld [vmem:[%s377 + $0x18] sm:$0xff]
        %v434 = vld [vmem:[%s377 + $0x20] sm:$0xff]
        %v435 = vld [vmem:[%s377 + $0x28] sm:$0xff]
        %v436 = vld [vmem:[%s377 + $0x30] sm:$0xff]
        %v437 = vld [vmem:[%s377 + $0x38] sm:$0xff]
        %v438 = vld [vmem:[%s377 + $0x40] sm:$0xff]
        %v439 = vld [vmem:[%s377 + $0x48] sm:$0xff]
        %v440 = vld [vmem:[%s377 + $0x50] sm:$0xff]
        %v441 = vld [vmem:[%s377 + $0x58] sm:$0xff]
        %v442 = vld [vmem:[%s377 + $0x60] sm:$0xff]
        %v443 = vld [vmem:[%s377 + $0x68] sm:$0xff]
        %v444 = vld [vmem:[%s377 + $0x70] sm:$0xff]
        %v445 = vld [vmem:[%s377 + $0x78] sm:$0xff]
        %454 = vrot.lane.b32.xlu0 %v430, 64
        %v455 = vpop.permute.xlu0 %454
        %456 = vrot.lane.b32.xlu0 %v432, 64
        %v457 = vpop.permute.xlu0 %456
        %458 = vrot.lane.b32.xlu0 %v434, 64
        %v459 = vpop.permute.xlu0 %458
        %460 = vrot.lane.b32.xlu0 %v436, 64
        %v461 = vpop.permute.xlu0 %460
        %462 = vrot.lane.b32.xlu0 %v438, 64
        %v463 = vpop.permute.xlu0 %462
        %464 = vrot.lane.b32.xlu0 %v440, 64
        %v465 = vpop.permute.xlu0 %464
        %466 = vrot.lane.b32.xlu0 %v442, 64
        %v467 = vpop.permute.xlu0 %466
        %468 = vrot.lane.b32.xlu0 %v444, 64
        %v469 = vpop.permute.xlu0 %468
        %v478 = vmax.f32 %v430, %v455
        %v479 = vmax.f32 %v432, %v457
        %v480 = vmax.f32 %v434, %v459
        %v481 = vmax.f32 %v436, %v461
        %v482 = vmax.f32 %v438, %v463
        %v483 = vmax.f32 %v440, %v465
        %v484 = vmax.f32 %v442, %v467
        %v485 = vmax.f32 %v444, %v469
        %494 = vrot.lane.b32.xlu0 %v431, 64
        %v495 = vpop.permute.xlu0 %494
        %496 = vrot.lane.b32.xlu0 %v433, 64
        %v497 = vpop.permute.xlu0 %496
        %498 = vrot.lane.b32.xlu0 %v435, 64
        %v499 = vpop.permute.xlu0 %498
        %500 = vrot.lane.b32.xlu0 %v437, 64
        %v501 = vpop.permute.xlu0 %500
        %502 = vrot.lane.b32.xlu0 %v439, 64
        %v503 = vpop.permute.xlu0 %502
        %504 = vrot.lane.b32.xlu0 %v441, 64
        %v505 = vpop.permute.xlu0 %504
        %506 = vrot.lane.b32.xlu0 %v443, 64
        %v507 = vpop.permute.xlu0 %506
        %508 = vrot.lane.b32.xlu0 %v445, 64
        %v509 = vpop.permute.xlu0 %508
        %v518 = vmax.f32 %v431, %v495
        %v519 = vmax.f32 %v433, %v497
        %v520 = vmax.f32 %v435, %v499
        %v521 = vmax.f32 %v437, %v501
        %v522 = vmax.f32 %v439, %v503
        %v523 = vmax.f32 %v441, %v505
        %v524 = vmax.f32 %v443, %v507
        %v525 = vmax.f32 %v445, %v509
        %v526 = vmax.f32 %v478, %v518
        %v527 = vmax.f32 %v479, %v519
        %v528 = vmax.f32 %v480, %v520
        %v529 = vmax.f32 %v481, %v521
        %v530 = vmax.f32 %v482, %v522
        %v531 = vmax.f32 %v483, %v523
        %v532 = vmax.f32 %v484, %v524
        %v533 = vmax.f32 %v485, %v525
        %v534 = vld [vmem:[#allocation5] sm:$0xff]
        %v535 = vld [vmem:[#allocation5 + $0x8] sm:$0xff]
        %v536 = vld [vmem:[#allocation5 + $0x10] sm:$0xff]
        %v537 = vld [vmem:[#allocation5 + $0x18] sm:$0xff]
        %v538 = vld [vmem:[#allocation5 + $0x20] sm:$0xff]
        %v539 = vld [vmem:[#allocation5 + $0x28] sm:$0xff]
        %v540 = vld [vmem:[#allocation5 + $0x30] sm:$0xff]
        %v541 = vld [vmem:[#allocation5 + $0x38] sm:$0xff]
        %vm542 = vcmask 523264
        %v544 = vsel %vm542, %v526, 0
        %v547 = vsel %vm542, %v527, 0
        %v550 = vsel %vm542, %v528, 0
        %v553 = vsel %vm542, %v529, 0
        %v556 = vsel %vm542, %v530, 0
        %v559 = vsel %vm542, %v531, 0
        %v562 = vsel %vm542, %v532, 0
        %v565 = vsel %vm542, %v533, 0
        %567 = vmatpush.msra.mxu0 0.0
        %568 = vmatpush.msra.mxu0 0.0
        %569 = vmatpush.msra.mxu0 0.0
        %570 = vmatpush.msra.mxu0 0.0
        %571 = vmatpush.msra.mxu0 0.0
        %572 = vmatpush.msra.mxu0 0.0
        %573 = vmatpush.msra.mxu0 0.0
        %574 = vmatpush.msra.mxu0 0.0
        %575 = vmatpush.msra.mxu0 %v541
        %576 = vmatpush.msra.mxu0 %v540
        %577 = vmatpush.msra.mxu0 %v539
        %578 = vmatpush.msra.mxu0 %v538
        %579 = vmatpush.msra.mxu0 %v537
        %580 = vmatpush.msra.mxu0 %v536
        %581 = vmatpush.msra.mxu0 %v535
        %582 = vmatpush.msra.mxu0 %v534
        %583 = vmatmul.f32.gmra.mxu0 %v544
        %v584 = vpop.f32.mrf.mxu0
        %v585 = vadd.f32 0.0, %v584
        %586 = vmatmul.f32.gmra.mxu0 %v547
        %v587 = vpop.f32.mrf.mxu0
        %v588 = vadd.f32 0.0, %v587
        %589 = vmatmul.f32.gmra.mxu0 %v550
        %v590 = vpop.f32.mrf.mxu0
        %v591 = vadd.f32 0.0, %v590
        %592 = vmatmul.f32.gmra.mxu0 %v553
        %v593 = vpop.f32.mrf.mxu0
        %v594 = vadd.f32 0.0, %v593
        %595 = vmatmul.f32.gmra.mxu0 %v556
        %v596 = vpop.f32.mrf.mxu0
        %v597 = vadd.f32 0.0, %v596
        %598 = vmatmul.f32.gmra.mxu0 %v559
        %v599 = vpop.f32.mrf.mxu0
        %v600 = vadd.f32 0.0, %v599
        %601 = vmatmul.f32.gmra.mxu0 %v562
        %v602 = vpop.f32.mrf.mxu0
        %v603 = vadd.f32 0.0, %v602
        %604 = vmatmul.f32.gmra.mxu0 %v565
        %v605 = vpop.f32.mrf.mxu0
        %v606 = vadd.f32 0.0, %v605
        %607 = vdwg.mxu0
        %v608 = vld [vmem:[%s2] sm:$0x1]
        %v610 = vperm.slane %v608, 0
        %v612 = vmul.f32 %v585, %v610
        %v613 = vmul.f32 %v588, %v610
        %v614 = vmul.f32 %v591, %v610
        %v615 = vmul.f32 %v594, %v610
        %v616 = vmul.f32 %v597, %v610
        %v617 = vmul.f32 %v600, %v610
        %v618 = vmul.f32 %v603, %v610
        %v619 = vmul.f32 %v606, %v610
        %v620 = vld [vmem:[%s3] sm:$0x1]
        %v622 = vperm.slane %v620, 0
        %v624 = vadd.f32 %v612, %v622
        %v625 = vadd.f32 %v613, %v622
        %v626 = vadd.f32 %v614, %v622
        %v627 = vadd.f32 %v615, %v622
        %v628 = vadd.f32 %v616, %v622
        %v629 = vadd.f32 %v617, %v622
        %v630 = vadd.f32 %v618, %v622
        %v631 = vadd.f32 %v619, %v622
        %v632 = vxor.u32 %v624, 2147483648
        %v633 = vxor.u32 %v625, 2147483648
        %v634 = vxor.u32 %v626, 2147483648
        %v635 = vxor.u32 %v627, 2147483648
        %v636 = vxor.u32 %v628, 2147483648
        %v637 = vxor.u32 %v629, 2147483648
        %v638 = vxor.u32 %v630, 2147483648
        %v639 = vxor.u32 %v631, 2147483648
        %v640 = vmul.f32 %v632, 1.442695
        %v641 = vpow.pop %v640
        %v642 = vmul.f32 %v633, 1.442695
        %v643 = vpow.pop %v642
        %v644 = vmul.f32 %v634, 1.442695
        %v645 = vpow.pop %v644
        %v646 = vmul.f32 %v635, 1.442695
        %v647 = vpow.pop %v646
        %v648 = vmul.f32 %v636, 1.442695
        %v649 = vpow.pop %v648
        %v650 = vmul.f32 %v637, 1.442695
        %v651 = vpow.pop %v650
        %v652 = vmul.f32 %v638, 1.442695
        %v653 = vpow.pop %v652
        %v654 = vmul.f32 %v639, 1.442695
        %v655 = vpow.pop %v654
        %v656 = vadd.f32 %v641, 1.0
        %v657 = vadd.f32 %v643, 1.0
        %v658 = vadd.f32 %v645, 1.0
        %v659 = vadd.f32 %v647, 1.0
        %v660 = vadd.f32 %v649, 1.0
        %v661 = vadd.f32 %v651, 1.0
        %v662 = vadd.f32 %v653, 1.0
        %v663 = vadd.f32 %v655, 1.0
        %v664 = vrcp.pop %v656
        %v665 = vmul.f32 %v656, %v664
        %v666 = vsub.f32 1.0, %v665
        %v667 = vmul.f32 %v664, %v666
        %v668 = vadd.f32 %v664, %v667
        %vm669 = vweird.f32 %v656
        %vm670 = vweird.f32 %v664
        %vm671 = vmor %vm669, %vm670
        %v672 = vsel %vm671, %v664, %v668
        %v673 = vand.u32 2147483647, %v656
        %vm674 = vcmp.eq.f32.partialorder %v673, 8.507059e+37
        %v675 = vand.u32 %v656, 2147483648
        %v676 = vor.u32 1.1754944e-38, %v675
        %v677 = vsel %vm674, %v676, %v672
        %v678 = vmul.f32 1.0, %v677
        %v679 = vrcp.pop %v657
        %v680 = vmul.f32 %v657, %v679
        %v681 = vsub.f32 1.0, %v680
        %v682 = vmul.f32 %v679, %v681
        %v683 = vadd.f32 %v679, %v682
        %vm684 = vweird.f32 %v657
        %vm685 = vweird.f32 %v679
        %vm686 = vmor %vm684, %vm685
        %v687 = vsel %vm686, %v679, %v683
        %v688 = vand.u32 2147483647, %v657
        %vm689 = vcmp.eq.f32.partialorder %v688, 8.507059e+37
        %v690 = vand.u32 %v657, 2147483648
        %v691 = vor.u32 1.1754944e-38, %v690
        %v692 = vsel %vm689, %v691, %v687
        %v693 = vmul.f32 1.0, %v692
        %v694 = vrcp.pop %v658
        %v695 = vmul.f32 %v658, %v694
        %v696 = vsub.f32 1.0, %v695
        %v697 = vmul.f32 %v694, %v696
        %v698 = vadd.f32 %v694, %v697
        %vm699 = vweird.f32 %v658
        %vm700 = vweird.f32 %v694
        %vm701 = vmor %vm699, %vm700
        %v702 = vsel %vm701, %v694, %v698
        %v703 = vand.u32 2147483647, %v658
        %vm704 = vcmp.eq.f32.partialorder %v703, 8.507059e+37
        %v705 = vand.u32 %v658, 2147483648
        %v706 = vor.u32 1.1754944e-38, %v705
        %v707 = vsel %vm704, %v706, %v702
        %v708 = vmul.f32 1.0, %v707
        %v709 = vrcp.pop %v659
        %v710 = vmul.f32 %v659, %v709
        %v711 = vsub.f32 1.0, %v710
        %v712 = vmul.f32 %v709, %v711
        %v713 = vadd.f32 %v709, %v712
        %vm714 = vweird.f32 %v659
        %vm715 = vweird.f32 %v709
        %vm716 = vmor %vm714, %vm715
        %v717 = vsel %vm716, %v709, %v713
        %v718 = vand.u32 2147483647, %v659
        %vm719 = vcmp.eq.f32.partialorder %v718, 8.507059e+37
        %v720 = vand.u32 %v659, 2147483648
        %v721 = vor.u32 1.1754944e-38, %v720
        %v722 = vsel %vm719, %v721, %v717
        %v723 = vmul.f32 1.0, %v722
        %v724 = vrcp.pop %v660
        %v725 = vmul.f32 %v660, %v724
        %v726 = vsub.f32 1.0, %v725
        %v727 = vmul.f32 %v724, %v726
        %v728 = vadd.f32 %v724, %v727
        %vm729 = vweird.f32 %v660
        %vm730 = vweird.f32 %v724
        %vm731 = vmor %vm729, %vm730
        %v732 = vsel %vm731, %v724, %v728
        %v733 = vand.u32 2147483647, %v660
        %vm734 = vcmp.eq.f32.partialorder %v733, 8.507059e+37
        %v735 = vand.u32 %v660, 2147483648
        %v736 = vor.u32 1.1754944e-38, %v735
        %v737 = vsel %vm734, %v736, %v732
        %v738 = vmul.f32 1.0, %v737
        %v739 = vrcp.pop %v661
        %v740 = vmul.f32 %v661, %v739
        %v741 = vsub.f32 1.0, %v740
        %v742 = vmul.f32 %v739, %v741
        %v743 = vadd.f32 %v739, %v742
        %vm744 = vweird.f32 %v661
        %vm745 = vweird.f32 %v739
        %vm746 = vmor %vm744, %vm745
        %v747 = vsel %vm746, %v739, %v743
        %v748 = vand.u32 2147483647, %v661
        %vm749 = vcmp.eq.f32.partialorder %v748, 8.507059e+37
        %v750 = vand.u32 %v661, 2147483648
        %v751 = vor.u32 1.1754944e-38, %v750
        %v752 = vsel %vm749, %v751, %v747
        %v753 = vmul.f32 1.0, %v752
        %v754 = vrcp.pop %v662
        %v755 = vmul.f32 %v662, %v754
        %v756 = vsub.f32 1.0, %v755
        %v757 = vmul.f32 %v754, %v756
        %v758 = vadd.f32 %v754, %v757
        %vm759 = vweird.f32 %v662
        %vm760 = vweird.f32 %v754
        %vm761 = vmor %vm759, %vm760
        %v762 = vsel %vm761, %v754, %v758
        %v763 = vand.u32 2147483647, %v662
        %vm764 = vcmp.eq.f32.partialorder %v763, 8.507059e+37
        %v765 = vand.u32 %v662, 2147483648
        %v766 = vor.u32 1.1754944e-38, %v765
        %v767 = vsel %vm764, %v766, %v762
        %v768 = vmul.f32 1.0, %v767
        %v769 = vrcp.pop %v663
        %v770 = vmul.f32 %v663, %v769
        %v771 = vsub.f32 1.0, %v770
        %v772 = vmul.f32 %v769, %v771
        %v773 = vadd.f32 %v769, %v772
        %vm774 = vweird.f32 %v663
        %vm775 = vweird.f32 %v769
        %vm776 = vmor %vm774, %vm775
        %v777 = vsel %vm776, %v769, %v773
        %v778 = vand.u32 2147483647, %v663
        %vm779 = vcmp.eq.f32.partialorder %v778, 8.507059e+37
        %v780 = vand.u32 %v663, 2147483648
        %v781 = vor.u32 1.1754944e-38, %v780
        %v782 = vsel %vm779, %v781, %v777
        %v783 = vmul.f32 1.0, %v782
        %v784 = vmul.f32 %v624, %v678
        %v785 = vmul.f32 %v625, %v693
        %v786 = vmul.f32 %v626, %v708
        %v787 = vmul.f32 %v627, %v723
        %v788 = vmul.f32 %v628, %v738
        %v789 = vmul.f32 %v629, %v753
        %v790 = vmul.f32 %v630, %v768
        %v791 = vmul.f32 %v631, %v783
        %v792 = vld [vmem:[#allocation7] sm:$0xff]
        %v793 = vld [vmem:[#allocation7 + $0x8] sm:$0xff]
        %v794 = vld [vmem:[#allocation7 + $0x10] sm:$0xff]
        %v795 = vld [vmem:[#allocation7 + $0x18] sm:$0xff]
        %v796 = vld [vmem:[#allocation7 + $0x20] sm:$0xff]
        %v797 = vld [vmem:[#allocation7 + $0x28] sm:$0xff]
        %v798 = vld [vmem:[#allocation7 + $0x30] sm:$0xff]
        %v799 = vld [vmem:[#allocation7 + $0x38] sm:$0xff]
        %v800 = vld [vmem:[%s5] sm:$0x1]
        %v801 = vld [vmem:[%s6] sm:$0x1]
        %v802 = vsel %vm542, %v430, 0
        %v804 = vsel %vm542, %v432, 0
        %v806 = vsel %vm542, %v434, 0
        %v808 = vsel %vm542, %v436, 0
        %v810 = vsel %vm542, %v438, 0
        %v812 = vsel %vm542, %v440, 0
        %v814 = vsel %vm542, %v442, 0
        %v816 = vsel %vm542, %v444, 0
        %818 = vmatpush.msra.mxu0 0.0
        %819 = vmatpush.msra.mxu0 0.0
        %820 = vmatpush.msra.mxu0 0.0
        %821 = vmatpush.msra.mxu0 0.0
        %822 = vmatpush.msra.mxu0 0.0
        %823 = vmatpush.msra.mxu0 0.0
        %824 = vmatpush.msra.mxu0 0.0
        %825 = vmatpush.msra.mxu0 0.0
        %826 = vmatpush.msra.mxu0 %v799
        %827 = vmatpush.msra.mxu0 %v798
        %828 = vmatpush.msra.mxu0 %v797
        %829 = vmatpush.msra.mxu0 %v796
        %830 = vmatpush.msra.mxu0 %v795
        %831 = vmatpush.msra.mxu0 %v794
        %832 = vmatpush.msra.mxu0 %v793
        %833 = vmatpush.msra.mxu0 %v792
        %834 = vmatmul.f32.gmra.mxu0 %v802
        %v835 = vpop.f32.mrf.mxu0
        %v836 = vadd.f32 0.0, %v835
        %837 = vmatmul.f32.gmra.mxu0 %v804
        %v838 = vpop.f32.mrf.mxu0
        %v839 = vadd.f32 0.0, %v838
        %840 = vmatmul.f32.gmra.mxu0 %v806
        %v841 = vpop.f32.mrf.mxu0
        %v842 = vadd.f32 0.0, %v841
        %843 = vmatmul.f32.gmra.mxu0 %v808
        %v844 = vpop.f32.mrf.mxu0
        %v845 = vadd.f32 0.0, %v844
        %846 = vmatmul.f32.gmra.mxu0 %v810
        %v847 = vpop.f32.mrf.mxu0
        %v848 = vadd.f32 0.0, %v847
        %849 = vmatmul.f32.gmra.mxu0 %v812
        %v850 = vpop.f32.mrf.mxu0
        %v851 = vadd.f32 0.0, %v850
        %852 = vmatmul.f32.gmra.mxu0 %v814
        %v853 = vpop.f32.mrf.mxu0
        %v854 = vadd.f32 0.0, %v853
        %855 = vmatmul.f32.gmra.mxu0 %v816
        %v856 = vpop.f32.mrf.mxu0
        %v857 = vadd.f32 0.0, %v856
        %858 = vdwg.mxu0
        %v860 = vperm.slane %v800, 0
        %v862 = vmul.f32 %v836, %v860
        %v863 = vmul.f32 %v839, %v860
        %v864 = vmul.f32 %v842, %v860
        %v865 = vmul.f32 %v845, %v860
        %v866 = vmul.f32 %v848, %v860
        %v867 = vmul.f32 %v851, %v860
        %v868 = vmul.f32 %v854, %v860
        %v869 = vmul.f32 %v857, %v860
        %v871 = vperm.slane %v801, 0
        %v873 = vadd.f32 %v862, %v871
        %v874 = vadd.f32 %v863, %v871
        %v875 = vadd.f32 %v864, %v871
        %v876 = vadd.f32 %v865, %v871
        %v877 = vadd.f32 %v866, %v871
        %v878 = vadd.f32 %v867, %v871
        %v879 = vadd.f32 %v868, %v871
        %v880 = vadd.f32 %v869, %v871
        %v881 = vxor.u32 %v873, 2147483648
        %v882 = vxor.u32 %v874, 2147483648
        %v883 = vxor.u32 %v875, 2147483648
        %v884 = vxor.u32 %v876, 2147483648
        %v885 = vxor.u32 %v877, 2147483648
        %v886 = vxor.u32 %v878, 2147483648
        %v887 = vxor.u32 %v879, 2147483648
        %v888 = vxor.u32 %v880, 2147483648
        %v889 = vmul.f32 %v881, 1.442695
        %v890 = vpow.pop %v889
        %v891 = vmul.f32 %v882, 1.442695
        %v892 = vpow.pop %v891
        %v893 = vmul.f32 %v883, 1.442695
        %v894 = vpow.pop %v893
        %v895 = vmul.f32 %v884, 1.442695
        %v896 = vpow.pop %v895
        %v897 = vmul.f32 %v885, 1.442695
        %v898 = vpow.pop %v897
        %v899 = vmul.f32 %v886, 1.442695
        %v900 = vpow.pop %v899
        %v901 = vmul.f32 %v887, 1.442695
        %v902 = vpow.pop %v901
        %v903 = vmul.f32 %v888, 1.442695
        %v904 = vpow.pop %v903
        %v905 = vadd.f32 %v890, 1.0
        %v906 = vadd.f32 %v892, 1.0
        %v907 = vadd.f32 %v894, 1.0
        %v908 = vadd.f32 %v896, 1.0
        %v909 = vadd.f32 %v898, 1.0
        %v910 = vadd.f32 %v900, 1.0
        %v911 = vadd.f32 %v902, 1.0
        %v912 = vadd.f32 %v904, 1.0
        %v913 = vrcp.pop %v905
        %v914 = vmul.f32 %v905, %v913
        %v915 = vsub.f32 1.0, %v914
        %v916 = vmul.f32 %v913, %v915
        %v917 = vadd.f32 %v913, %v916
        %vm918 = vweird.f32 %v905
        %vm919 = vweird.f32 %v913
        %vm920 = vmor %vm918, %vm919
        %v921 = vsel %vm920, %v913, %v917
        %v922 = vand.u32 2147483647, %v905
        %vm923 = vcmp.eq.f32.partialorder %v922, 8.507059e+37
        %v924 = vand.u32 %v905, 2147483648
        %v925 = vor.u32 1.1754944e-38, %v924
        %v926 = vsel %vm923, %v925, %v921
        %v927 = vmul.f32 1.0, %v926
        %v928 = vrcp.pop %v906
        %v929 = vmul.f32 %v906, %v928
        %v930 = vsub.f32 1.0, %v929
        %v931 = vmul.f32 %v928, %v930
        %v932 = vadd.f32 %v928, %v931
        %vm933 = vweird.f32 %v906
        %vm934 = vweird.f32 %v928
        %vm935 = vmor %vm933, %vm934
        %v936 = vsel %vm935, %v928, %v932
        %v937 = vand.u32 2147483647, %v906
        %vm938 = vcmp.eq.f32.partialorder %v937, 8.507059e+37
        %v939 = vand.u32 %v906, 2147483648
        %v940 = vor.u32 1.1754944e-38, %v939
        %v941 = vsel %vm938, %v940, %v936
        %v942 = vmul.f32 1.0, %v941
        %v943 = vrcp.pop %v907
        %v944 = vmul.f32 %v907, %v943
        %v945 = vsub.f32 1.0, %v944
        %v946 = vmul.f32 %v943, %v945
        %v947 = vadd.f32 %v943, %v946
        %vm948 = vweird.f32 %v907
        %vm949 = vweird.f32 %v943
        %vm950 = vmor %vm948, %vm949
        %v951 = vsel %vm950, %v943, %v947
        %v952 = vand.u32 2147483647, %v907
        %vm953 = vcmp.eq.f32.partialorder %v952, 8.507059e+37
        %v954 = vand.u32 %v907, 2147483648
        %v955 = vor.u32 1.1754944e-38, %v954
        %v956 = vsel %vm953, %v955, %v951
        %v957 = vmul.f32 1.0, %v956
        %v958 = vrcp.pop %v908
        %v959 = vmul.f32 %v908, %v958
        %v960 = vsub.f32 1.0, %v959
        %v961 = vmul.f32 %v958, %v960
        %v962 = vadd.f32 %v958, %v961
        %vm963 = vweird.f32 %v908
        %vm964 = vweird.f32 %v958
        %vm965 = vmor %vm963, %vm964
        %v966 = vsel %vm965, %v958, %v962
        %v967 = vand.u32 2147483647, %v908
        %vm968 = vcmp.eq.f32.partialorder %v967, 8.507059e+37
        %v969 = vand.u32 %v908, 2147483648
        %v970 = vor.u32 1.1754944e-38, %v969
        %v971 = vsel %vm968, %v970, %v966
        %v972 = vmul.f32 1.0, %v971
        %v973 = vrcp.pop %v909
        %v974 = vmul.f32 %v909, %v973
        %v975 = vsub.f32 1.0, %v974
        %v976 = vmul.f32 %v973, %v975
        %v977 = vadd.f32 %v973, %v976
        %vm978 = vweird.f32 %v909
        %vm979 = vweird.f32 %v973
        %vm980 = vmor %vm978, %vm979
        %v981 = vsel %vm980, %v973, %v977
        %v982 = vand.u32 2147483647, %v909
        %vm983 = vcmp.eq.f32.partialorder %v982, 8.507059e+37
        %v984 = vand.u32 %v909, 2147483648
        %v985 = vor.u32 1.1754944e-38, %v984
        %v986 = vsel %vm983, %v985, %v981
        %v987 = vmul.f32 1.0, %v986
        %v988 = vrcp.pop %v910
        %v989 = vmul.f32 %v910, %v988
        %v990 = vsub.f32 1.0, %v989
        %v991 = vmul.f32 %v988, %v990
        %v992 = vadd.f32 %v988, %v991
        %vm993 = vweird.f32 %v910
        %vm994 = vweird.f32 %v988
        %vm995 = vmor %vm993, %vm994
        %v996 = vsel %vm995, %v988, %v992
        %v997 = vand.u32 2147483647, %v910
        %vm998 = vcmp.eq.f32.partialorder %v997, 8.507059e+37
        %v999 = vand.u32 %v910, 2147483648
        %v1000 = vor.u32 1.1754944e-38, %v999
        %v1001 = vsel %vm998, %v1000, %v996
        %v1002 = vmul.f32 1.0, %v1001
        %v1003 = vrcp.pop %v911
        %v1004 = vmul.f32 %v911, %v1003
        %v1005 = vsub.f32 1.0, %v1004
        %v1006 = vmul.f32 %v1003, %v1005
        %v1007 = vadd.f32 %v1003, %v1006
        %vm1008 = vweird.f32 %v911
        %vm1009 = vweird.f32 %v1003
        %vm1010 = vmor %vm1008, %vm1009
        %v1011 = vsel %vm1010, %v1003, %v1007
        %v1012 = vand.u32 2147483647, %v911
        %vm1013 = vcmp.eq.f32.partialorder %v1012, 8.507059e+37
        %v1014 = vand.u32 %v911, 2147483648
        %v1015 = vor.u32 1.1754944e-38, %v1014
        %v1016 = vsel %vm1013, %v1015, %v1011
        %v1017 = vmul.f32 1.0, %v1016
        %v1018 = vrcp.pop %v912
        %v1019 = vmul.f32 %v912, %v1018
        %v1020 = vsub.f32 1.0, %v1019
        %v1021 = vmul.f32 %v1018, %v1020
        %v1022 = vadd.f32 %v1018, %v1021
        %vm1023 = vweird.f32 %v912
        %vm1024 = vweird.f32 %v1018
        %vm1025 = vmor %vm1023, %vm1024
        %v1026 = vsel %vm1025, %v1018, %v1022
        %v1027 = vand.u32 2147483647, %v912
        %vm1028 = vcmp.eq.f32.partialorder %v1027, 8.507059e+37
        %v1029 = vand.u32 %v912, 2147483648
        %v1030 = vor.u32 1.1754944e-38, %v1029
        %v1031 = vsel %vm1028, %v1030, %v1026
        %v1032 = vmul.f32 1.0, %v1031
        %v1033 = vmul.f32 %v873, %v927
        %v1034 = vmul.f32 %v874, %v942
        %v1035 = vmul.f32 %v875, %v957
        %v1036 = vmul.f32 %v876, %v972
        %v1037 = vmul.f32 %v877, %v987
        %v1038 = vmul.f32 %v878, %v1002
        %v1039 = vmul.f32 %v879, %v1017
        %v1040 = vmul.f32 %v880, %v1032
        %v1041 = vsel %vm542, %v455, 0
        %v1043 = vsel %vm542, %v457, 0
        %v1045 = vsel %vm542, %v459, 0
        %v1047 = vsel %vm542, %v461, 0
        %v1049 = vsel %vm542, %v463, 0
        %v1051 = vsel %vm542, %v465, 0
        %v1053 = vsel %vm542, %v467, 0
        %v1055 = vsel %vm542, %v469, 0
        %1057 = vmatpush.msra.mxu0 0.0
        %1058 = vmatpush.msra.mxu0 0.0
        %1059 = vmatpush.msra.mxu0 0.0
        %1060 = vmatpush.msra.mxu0 0.0
        %1061 = vmatpush.msra.mxu0 0.0
        %1062 = vmatpush.msra.mxu0 0.0
        %1063 = vmatpush.msra.mxu0 0.0
        %1064 = vmatpush.msra.mxu0 0.0
        %1065 = vmatpush.msra.mxu0 %v799
        %1066 = vmatpush.msra.mxu0 %v798
        %1067 = vmatpush.msra.mxu0 %v797
        %1068 = vmatpush.msra.mxu0 %v796
        %1069 = vmatpush.msra.mxu0 %v795
        %1070 = vmatpush.msra.mxu0 %v794
        %1071 = vmatpush.msra.mxu0 %v793
        %1072 = vmatpush.msra.mxu0 %v792
        %1073 = vmatmul.f32.gmra.mxu0 %v1041
        %v1074 = vpop.f32.mrf.mxu0
        %v1075 = vadd.f32 0.0, %v1074
        %1076 = vmatmul.f32.gmra.mxu0 %v1043
        %v1077 = vpop.f32.mrf.mxu0
        %v1078 = vadd.f32 0.0, %v1077
        %1079 = vmatmul.f32.gmra.mxu0 %v1045
        %v1080 = vpop.f32.mrf.mxu0
        %v1081 = vadd.f32 0.0, %v1080
        %1082 = vmatmul.f32.gmra.mxu0 %v1047
        %v1083 = vpop.f32.mrf.mxu0
        %v1084 = vadd.f32 0.0, %v1083
        %1085 = vmatmul.f32.gmra.mxu0 %v1049
        %v1086 = vpop.f32.mrf.mxu0
        %v1087 = vadd.f32 0.0, %v1086
        %1088 = vmatmul.f32.gmra.mxu0 %v1051
        %v1089 = vpop.f32.mrf.mxu0
        %v1090 = vadd.f32 0.0, %v1089
        %1091 = vmatmul.f32.gmra.mxu0 %v1053
        %v1092 = vpop.f32.mrf.mxu0
        %v1093 = vadd.f32 0.0, %v1092
        %1094 = vmatmul.f32.gmra.mxu0 %v1055
        %v1095 = vpop.f32.mrf.mxu0
        %v1096 = vadd.f32 0.0, %v1095
        %1097 = vdwg.mxu0
        %v1098 = vmul.f32 %v1075, %v860
        %v1099 = vmul.f32 %v1078, %v860
        %v1100 = vmul.f32 %v1081, %v860
        %v1101 = vmul.f32 %v1084, %v860
        %v1102 = vmul.f32 %v1087, %v860
        %v1103 = vmul.f32 %v1090, %v860
        %v1104 = vmul.f32 %v1093, %v860
        %v1105 = vmul.f32 %v1096, %v860
        %v1106 = vadd.f32 %v1098, %v871
        %v1107 = vadd.f32 %v1099, %v871
        %v1108 = vadd.f32 %v1100, %v871
        %v1109 = vadd.f32 %v1101, %v871
        %v1110 = vadd.f32 %v1102, %v871
        %v1111 = vadd.f32 %v1103, %v871
        %v1112 = vadd.f32 %v1104, %v871
        %v1113 = vadd.f32 %v1105, %v871
        %v1114 = vxor.u32 %v1106, 2147483648
        %v1115 = vxor.u32 %v1107, 2147483648
        %v1116 = vxor.u32 %v1108, 2147483648
        %v1117 = vxor.u32 %v1109, 2147483648
        %v1118 = vxor.u32 %v1110, 2147483648
        %v1119 = vxor.u32 %v1111, 2147483648
        %v1120 = vxor.u32 %v1112, 2147483648
        %v1121 = vxor.u32 %v1113, 2147483648
        %v1122 = vmul.f32 %v1114, 1.442695
        %v1123 = vpow.pop %v1122
        %v1124 = vmul.f32 %v1115, 1.442695
        %v1125 = vpow.pop %v1124
        %v1126 = vmul.f32 %v1116, 1.442695
        %v1127 = vpow.pop %v1126
        %v1128 = vmul.f32 %v1117, 1.442695
        %v1129 = vpow.pop %v1128
        %v1130 = vmul.f32 %v1118, 1.442695
        %v1131 = vpow.pop %v1130
        %v1132 = vmul.f32 %v1119, 1.442695
        %v1133 = vpow.pop %v1132
        %v1134 = vmul.f32 %v1120, 1.442695
        %v1135 = vpow.pop %v1134
        %v1136 = vmul.f32 %v1121, 1.442695
        %v1137 = vpow.pop %v1136
        %v1138 = vadd.f32 %v1123, 1.0
        %v1139 = vadd.f32 %v1125, 1.0
        %v1140 = vadd.f32 %v1127, 1.0
        %v1141 = vadd.f32 %v1129, 1.0
        %v1142 = vadd.f32 %v1131, 1.0
        %v1143 = vadd.f32 %v1133, 1.0
        %v1144 = vadd.f32 %v1135, 1.0
        %v1145 = vadd.f32 %v1137, 1.0
        %v1146 = vrcp.pop %v1138
        %v1147 = vmul.f32 %v1138, %v1146
        %v1148 = vsub.f32 1.0, %v1147
        %v1149 = vmul.f32 %v1146, %v1148
        %v1150 = vadd.f32 %v1146, %v1149
        %vm1151 = vweird.f32 %v1138
        %vm1152 = vweird.f32 %v1146
        %vm1153 = vmor %vm1151, %vm1152
        %v1154 = vsel %vm1153, %v1146, %v1150
        %v1155 = vand.u32 2147483647, %v1138
        %vm1156 = vcmp.eq.f32.partialorder %v1155, 8.507059e+37
        %v1157 = vand.u32 %v1138, 2147483648
        %v1158 = vor.u32 1.1754944e-38, %v1157
        %v1159 = vsel %vm1156, %v1158, %v1154
        %v1160 = vmul.f32 1.0, %v1159
        %v1161 = vrcp.pop %v1139
        %v1162 = vmul.f32 %v1139, %v1161
        %v1163 = vsub.f32 1.0, %v1162
        %v1164 = vmul.f32 %v1161, %v1163
        %v1165 = vadd.f32 %v1161, %v1164
        %vm1166 = vweird.f32 %v1139
        %vm1167 = vweird.f32 %v1161
        %vm1168 = vmor %vm1166, %vm1167
        %v1169 = vsel %vm1168, %v1161, %v1165
        %v1170 = vand.u32 2147483647, %v1139
        %vm1171 = vcmp.eq.f32.partialorder %v1170, 8.507059e+37
        %v1172 = vand.u32 %v1139, 2147483648
        %v1173 = vor.u32 1.1754944e-38, %v1172
        %v1174 = vsel %vm1171, %v1173, %v1169
        %v1175 = vmul.f32 1.0, %v1174
        %v1176 = vrcp.pop %v1140
        %v1177 = vmul.f32 %v1140, %v1176
        %v1178 = vsub.f32 1.0, %v1177
        %v1179 = vmul.f32 %v1176, %v1178
        %v1180 = vadd.f32 %v1176, %v1179
        %vm1181 = vweird.f32 %v1140
        %vm1182 = vweird.f32 %v1176
        %vm1183 = vmor %vm1181, %vm1182
        %v1184 = vsel %vm1183, %v1176, %v1180
        %v1185 = vand.u32 2147483647, %v1140
        %vm1186 = vcmp.eq.f32.partialorder %v1185, 8.507059e+37
        %v1187 = vand.u32 %v1140, 2147483648
        %v1188 = vor.u32 1.1754944e-38, %v1187
        %v1189 = vsel %vm1186, %v1188, %v1184
        %v1190 = vmul.f32 1.0, %v1189
        %v1191 = vrcp.pop %v1141
        %v1192 = vmul.f32 %v1141, %v1191
        %v1193 = vsub.f32 1.0, %v1192
        %v1194 = vmul.f32 %v1191, %v1193
        %v1195 = vadd.f32 %v1191, %v1194
        %vm1196 = vweird.f32 %v1141
        %vm1197 = vweird.f32 %v1191
        %vm1198 = vmor %vm1196, %vm1197
        %v1199 = vsel %vm1198, %v1191, %v1195
        %v1200 = vand.u32 2147483647, %v1141
        %vm1201 = vcmp.eq.f32.partialorder %v1200, 8.507059e+37
        %v1202 = vand.u32 %v1141, 2147483648
        %v1203 = vor.u32 1.1754944e-38, %v1202
        %v1204 = vsel %vm1201, %v1203, %v1199
        %v1205 = vmul.f32 1.0, %v1204
        %v1206 = vrcp.pop %v1142
        %v1207 = vmul.f32 %v1142, %v1206
        %v1208 = vsub.f32 1.0, %v1207
        %v1209 = vmul.f32 %v1206, %v1208
        %v1210 = vadd.f32 %v1206, %v1209
        %vm1211 = vweird.f32 %v1142
        %vm1212 = vweird.f32 %v1206
        %vm1213 = vmor %vm1211, %vm1212
        %v1214 = vsel %vm1213, %v1206, %v1210
        %v1215 = vand.u32 2147483647, %v1142
        %vm1216 = vcmp.eq.f32.partialorder %v1215, 8.507059e+37
        %v1217 = vand.u32 %v1142, 2147483648
        %v1218 = vor.u32 1.1754944e-38, %v1217
        %v1219 = vsel %vm1216, %v1218, %v1214
        %v1220 = vmul.f32 1.0, %v1219
        %v1221 = vrcp.pop %v1143
        %v1222 = vmul.f32 %v1143, %v1221
        %v1223 = vsub.f32 1.0, %v1222
        %v1224 = vmul.f32 %v1221, %v1223
        %v1225 = vadd.f32 %v1221, %v1224
        %vm1226 = vweird.f32 %v1143
        %vm1227 = vweird.f32 %v1221
        %vm1228 = vmor %vm1226, %vm1227
        %v1229 = vsel %vm1228, %v1221, %v1225
        %v1230 = vand.u32 2147483647, %v1143
        %vm1231 = vcmp.eq.f32.partialorder %v1230, 8.507059e+37
        %v1232 = vand.u32 %v1143, 2147483648
        %v1233 = vor.u32 1.1754944e-38, %v1232
        %v1234 = vsel %vm1231, %v1233, %v1229
        %v1235 = vmul.f32 1.0, %v1234
        %v1236 = vrcp.pop %v1144
        %v1237 = vmul.f32 %v1144, %v1236
        %v1238 = vsub.f32 1.0, %v1237
        %v1239 = vmul.f32 %v1236, %v1238
        %v1240 = vadd.f32 %v1236, %v1239
        %vm1241 = vweird.f32 %v1144
        %vm1242 = vweird.f32 %v1236
        %vm1243 = vmor %vm1241, %vm1242
        %v1244 = vsel %vm1243, %v1236, %v1240
        %v1245 = vand.u32 2147483647, %v1144
        %vm1246 = vcmp.eq.f32.partialorder %v1245, 8.507059e+37
        %v1247 = vand.u32 %v1144, 2147483648
        %v1248 = vor.u32 1.1754944e-38, %v1247
        %v1249 = vsel %vm1246, %v1248, %v1244
        %v1250 = vmul.f32 1.0, %v1249
        %v1251 = vrcp.pop %v1145
        %v1252 = vmul.f32 %v1145, %v1251
        %v1253 = vsub.f32 1.0, %v1252
        %v1254 = vmul.f32 %v1251, %v1253
        %v1255 = vadd.f32 %v1251, %v1254
        %vm1256 = vweird.f32 %v1145
        %vm1257 = vweird.f32 %v1251
        %vm1258 = vmor %vm1256, %vm1257
        %v1259 = vsel %vm1258, %v1251, %v1255
        %v1260 = vand.u32 2147483647, %v1145
        %vm1261 = vcmp.eq.f32.partialorder %v1260, 8.507059e+37
        %v1262 = vand.u32 %v1145, 2147483648
        %v1263 = vor.u32 1.1754944e-38, %v1262
        %v1264 = vsel %vm1261, %v1263, %v1259
        %v1265 = vmul.f32 1.0, %v1264
        %v1266 = vmul.f32 %v1106, %v1160
        %v1267 = vmul.f32 %v1107, %v1175
        %v1268 = vmul.f32 %v1108, %v1190
        %v1269 = vmul.f32 %v1109, %v1205
        %v1270 = vmul.f32 %v1110, %v1220
        %v1271 = vmul.f32 %v1111, %v1235
        %v1272 = vmul.f32 %v1112, %v1250
        %v1273 = vmul.f32 %v1113, %v1265
        %v1274 = vsel %vm542, %v431, 0
        %v1276 = vsel %vm542, %v433, 0
        %v1278 = vsel %vm542, %v435, 0
        %v1280 = vsel %vm542, %v437, 0
        %v1282 = vsel %vm542, %v439, 0
        %v1284 = vsel %vm542, %v441, 0
        %v1286 = vsel %vm542, %v443, 0
        %v1288 = vsel %vm542, %v445, 0
        %1290 = vmatpush.msra.mxu0 0.0
        %1291 = vmatpush.msra.mxu0 0.0
        %1292 = vmatpush.msra.mxu0 0.0
        %1293 = vmatpush.msra.mxu0 0.0
        %1294 = vmatpush.msra.mxu0 0.0
        %1295 = vmatpush.msra.mxu0 0.0
        %1296 = vmatpush.msra.mxu0 0.0
        %1297 = vmatpush.msra.mxu0 0.0
        %1298 = vmatpush.msra.mxu0 %v799
        %1299 = vmatpush.msra.mxu0 %v798
        %1300 = vmatpush.msra.mxu0 %v797
        %1301 = vmatpush.msra.mxu0 %v796
        %1302 = vmatpush.msra.mxu0 %v795
        %1303 = vmatpush.msra.mxu0 %v794
        %1304 = vmatpush.msra.mxu0 %v793
        %1305 = vmatpush.msra.mxu0 %v792
        %1306 = vmatmul.f32.gmra.mxu0 %v1274
        %v1307 = vpop.f32.mrf.mxu0
        %v1308 = vadd.f32 0.0, %v1307
        %1309 = vmatmul.f32.gmra.mxu0 %v1276
        %v1310 = vpop.f32.mrf.mxu0
        %v1311 = vadd.f32 0.0, %v1310
        %1312 = vmatmul.f32.gmra.mxu0 %v1278
        %v1313 = vpop.f32.mrf.mxu0
        %v1314 = vadd.f32 0.0, %v1313
        %1315 = vmatmul.f32.gmra.mxu0 %v1280
        %v1316 = vpop.f32.mrf.mxu0
        %v1317 = vadd.f32 0.0, %v1316
        %1318 = vmatmul.f32.gmra.mxu0 %v1282
        %v1319 = vpop.f32.mrf.mxu0
        %v1320 = vadd.f32 0.0, %v1319
        %1321 = vmatmul.f32.gmra.mxu0 %v1284
        %v1322 = vpop.f32.mrf.mxu0
        %v1323 = vadd.f32 0.0, %v1322
        %1324 = vmatmul.f32.gmra.mxu0 %v1286
        %v1325 = vpop.f32.mrf.mxu0
        %v1326 = vadd.f32 0.0, %v1325
        %1327 = vmatmul.f32.gmra.mxu0 %v1288
        %v1328 = vpop.f32.mrf.mxu0
        %v1329 = vadd.f32 0.0, %v1328
        %1330 = vdwg.mxu0
        %v1331 = vmul.f32 %v1308, %v860
        %v1332 = vmul.f32 %v1311, %v860
        %v1333 = vmul.f32 %v1314, %v860
        %v1334 = vmul.f32 %v1317, %v860
        %v1335 = vmul.f32 %v1320, %v860
        %v1336 = vmul.f32 %v1323, %v860
        %v1337 = vmul.f32 %v1326, %v860
        %v1338 = vmul.f32 %v1329, %v860
        %v1339 = vadd.f32 %v1331, %v871
        %v1340 = vadd.f32 %v1332, %v871
        %v1341 = vadd.f32 %v1333, %v871
        %v1342 = vadd.f32 %v1334, %v871
        %v1343 = vadd.f32 %v1335, %v871
        %v1344 = vadd.f32 %v1336, %v871
        %v1345 = vadd.f32 %v1337, %v871
        %v1346 = vadd.f32 %v1338, %v871
        %v1347 = vxor.u32 %v1339, 2147483648
        %v1348 = vxor.u32 %v1340, 2147483648
        %v1349 = vxor.u32 %v1341, 2147483648
        %v1350 = vxor.u32 %v1342, 2147483648
        %v1351 = vxor.u32 %v1343, 2147483648
        %v1352 = vxor.u32 %v1344, 2147483648
        %v1353 = vxor.u32 %v1345, 2147483648
        %v1354 = vxor.u32 %v1346, 2147483648
        %v1355 = vmul.f32 %v1347, 1.442695
        %v1356 = vpow.pop %v1355
        %v1357 = vmul.f32 %v1348, 1.442695
        %v1358 = vpow.pop %v1357
        %v1359 = vmul.f32 %v1349, 1.442695
        %v1360 = vpow.pop %v1359
        %v1361 = vmul.f32 %v1350, 1.442695
        %v1362 = vpow.pop %v1361
        %v1363 = vmul.f32 %v1351, 1.442695
        %v1364 = vpow.pop %v1363
        %v1365 = vmul.f32 %v1352, 1.442695
        %v1366 = vpow.pop %v1365
        %v1367 = vmul.f32 %v1353, 1.442695
        %v1368 = vpow.pop %v1367
        %v1369 = vmul.f32 %v1354, 1.442695
        %v1370 = vpow.pop %v1369
        %v1371 = vadd.f32 %v1356, 1.0
        %v1372 = vadd.f32 %v1358, 1.0
        %v1373 = vadd.f32 %v1360, 1.0
        %v1374 = vadd.f32 %v1362, 1.0
        %v1375 = vadd.f32 %v1364, 1.0
        %v1376 = vadd.f32 %v1366, 1.0
        %v1377 = vadd.f32 %v1368, 1.0
        %v1378 = vadd.f32 %v1370, 1.0
        %v1379 = vrcp.pop %v1371
        %v1380 = vmul.f32 %v1371, %v1379
        %v1381 = vsub.f32 1.0, %v1380
        %v1382 = vmul.f32 %v1379, %v1381
        %v1383 = vadd.f32 %v1379, %v1382
        %vm1384 = vweird.f32 %v1371
        %vm1385 = vweird.f32 %v1379
        %vm1386 = vmor %vm1384, %vm1385
        %v1387 = vsel %vm1386, %v1379, %v1383
        %v1388 = vand.u32 2147483647, %v1371
        %vm1389 = vcmp.eq.f32.partialorder %v1388, 8.507059e+37
        %v1390 = vand.u32 %v1371, 2147483648
        %v1391 = vor.u32 1.1754944e-38, %v1390
        %v1392 = vsel %vm1389, %v1391, %v1387
        %v1393 = vmul.f32 1.0, %v1392
        %v1394 = vrcp.pop %v1372
        %v1395 = vmul.f32 %v1372, %v1394
        %v1396 = vsub.f32 1.0, %v1395
        %v1397 = vmul.f32 %v1394, %v1396
        %v1398 = vadd.f32 %v1394, %v1397
        %vm1399 = vweird.f32 %v1372
        %vm1400 = vweird.f32 %v1394
        %vm1401 = vmor %vm1399, %vm1400
        %v1402 = vsel %vm1401, %v1394, %v1398
        %v1403 = vand.u32 2147483647, %v1372
        %vm1404 = vcmp.eq.f32.partialorder %v1403, 8.507059e+37
        %v1405 = vand.u32 %v1372, 2147483648
        %v1406 = vor.u32 1.1754944e-38, %v1405
        %v1407 = vsel %vm1404, %v1406, %v1402
        %v1408 = vmul.f32 1.0, %v1407
        %v1409 = vrcp.pop %v1373
        %v1410 = vmul.f32 %v1373, %v1409
        %v1411 = vsub.f32 1.0, %v1410
        %v1412 = vmul.f32 %v1409, %v1411
        %v1413 = vadd.f32 %v1409, %v1412
        %vm1414 = vweird.f32 %v1373
        %vm1415 = vweird.f32 %v1409
        %vm1416 = vmor %vm1414, %vm1415
        %v1417 = vsel %vm1416, %v1409, %v1413
        %v1418 = vand.u32 2147483647, %v1373
        %vm1419 = vcmp.eq.f32.partialorder %v1418, 8.507059e+37
        %v1420 = vand.u32 %v1373, 2147483648
        %v1421 = vor.u32 1.1754944e-38, %v1420
        %v1422 = vsel %vm1419, %v1421, %v1417
        %v1423 = vmul.f32 1.0, %v1422
        %v1424 = vrcp.pop %v1374
        %v1425 = vmul.f32 %v1374, %v1424
        %v1426 = vsub.f32 1.0, %v1425
        %v1427 = vmul.f32 %v1424, %v1426
        %v1428 = vadd.f32 %v1424, %v1427
        %vm1429 = vweird.f32 %v1374
        %vm1430 = vweird.f32 %v1424
        %vm1431 = vmor %vm1429, %vm1430
        %v1432 = vsel %vm1431, %v1424, %v1428
        %v1433 = vand.u32 2147483647, %v1374
        %vm1434 = vcmp.eq.f32.partialorder %v1433, 8.507059e+37
        %v1435 = vand.u32 %v1374, 2147483648
        %v1436 = vor.u32 1.1754944e-38, %v1435
        %v1437 = vsel %vm1434, %v1436, %v1432
        %v1438 = vmul.f32 1.0, %v1437
        %v1439 = vrcp.pop %v1375
        %v1440 = vmul.f32 %v1375, %v1439
        %v1441 = vsub.f32 1.0, %v1440
        %v1442 = vmul.f32 %v1439, %v1441
        %v1443 = vadd.f32 %v1439, %v1442
        %vm1444 = vweird.f32 %v1375
        %vm1445 = vweird.f32 %v1439
        %vm1446 = vmor %vm1444, %vm1445
        %v1447 = vsel %vm1446, %v1439, %v1443
        %v1448 = vand.u32 2147483647, %v1375
        %vm1449 = vcmp.eq.f32.partialorder %v1448, 8.507059e+37
        %v1450 = vand.u32 %v1375, 2147483648
        %v1451 = vor.u32 1.1754944e-38, %v1450
        %v1452 = vsel %vm1449, %v1451, %v1447
        %v1453 = vmul.f32 1.0, %v1452
        %v1454 = vrcp.pop %v1376
        %v1455 = vmul.f32 %v1376, %v1454
        %v1456 = vsub.f32 1.0, %v1455
        %v1457 = vmul.f32 %v1454, %v1456
        %v1458 = vadd.f32 %v1454, %v1457
        %vm1459 = vweird.f32 %v1376
        %vm1460 = vweird.f32 %v1454
        %vm1461 = vmor %vm1459, %vm1460
        %v1462 = vsel %vm1461, %v1454, %v1458
        %v1463 = vand.u32 2147483647, %v1376
        %vm1464 = vcmp.eq.f32.partialorder %v1463, 8.507059e+37
        %v1465 = vand.u32 %v1376, 2147483648
        %v1466 = vor.u32 1.1754944e-38, %v1465
        %v1467 = vsel %vm1464, %v1466, %v1462
        %v1468 = vmul.f32 1.0, %v1467
        %v1469 = vrcp.pop %v1377
        %v1470 = vmul.f32 %v1377, %v1469
        %v1471 = vsub.f32 1.0, %v1470
        %v1472 = vmul.f32 %v1469, %v1471
        %v1473 = vadd.f32 %v1469, %v1472
        %vm1474 = vweird.f32 %v1377
        %vm1475 = vweird.f32 %v1469
        %vm1476 = vmor %vm1474, %vm1475
        %v1477 = vsel %vm1476, %v1469, %v1473
        %v1478 = vand.u32 2147483647, %v1377
        %vm1479 = vcmp.eq.f32.partialorder %v1478, 8.507059e+37
        %v1480 = vand.u32 %v1377, 2147483648
        %v1481 = vor.u32 1.1754944e-38, %v1480
        %v1482 = vsel %vm1479, %v1481, %v1477
        %v1483 = vmul.f32 1.0, %v1482
        %v1484 = vrcp.pop %v1378
        %v1485 = vmul.f32 %v1378, %v1484
        %v1486 = vsub.f32 1.0, %v1485
        %v1487 = vmul.f32 %v1484, %v1486
        %v1488 = vadd.f32 %v1484, %v1487
        %vm1489 = vweird.f32 %v1378
        %vm1490 = vweird.f32 %v1484
        %vm1491 = vmor %vm1489, %vm1490
        %v1492 = vsel %vm1491, %v1484, %v1488
        %v1493 = vand.u32 2147483647, %v1378
        %vm1494 = vcmp.eq.f32.partialorder %v1493, 8.507059e+37
        %v1495 = vand.u32 %v1378, 2147483648
        %v1496 = vor.u32 1.1754944e-38, %v1495
        %v1497 = vsel %vm1494, %v1496, %v1492
        %v1498 = vmul.f32 1.0, %v1497
        %v1499 = vmul.f32 %v1339, %v1393
        %v1500 = vmul.f32 %v1340, %v1408
        %v1501 = vmul.f32 %v1341, %v1423
        %v1502 = vmul.f32 %v1342, %v1438
        %v1503 = vmul.f32 %v1343, %v1453
        %v1504 = vmul.f32 %v1344, %v1468
        %v1505 = vmul.f32 %v1345, %v1483
        %v1506 = vmul.f32 %v1346, %v1498
        %v1507 = vsel %vm542, %v495, 0
        %v1509 = vsel %vm542, %v497, 0
        %v1511 = vsel %vm542, %v499, 0
        %v1513 = vsel %vm542, %v501, 0
        %v1515 = vsel %vm542, %v503, 0
        %v1517 = vsel %vm542, %v505, 0
        %v1519 = vsel %vm542, %v507, 0
        %v1521 = vsel %vm542, %v509, 0
        %1523 = vmatpush.msra.mxu0 0.0
        %1524 = vmatpush.msra.mxu0 0.0
        %1525 = vmatpush.msra.mxu0 0.0
        %1526 = vmatpush.msra.mxu0 0.0
        %1527 = vmatpush.msra.mxu0 0.0
        %1528 = vmatpush.msra.mxu0 0.0
        %1529 = vmatpush.msra.mxu0 0.0
        %1530 = vmatpush.msra.mxu0 0.0
        %1531 = vmatpush.msra.mxu0 %v799
        %1532 = vmatpush.msra.mxu0 %v798
        %1533 = vmatpush.msra.mxu0 %v797
        %1534 = vmatpush.msra.mxu0 %v796
        %1535 = vmatpush.msra.mxu0 %v795
        %1536 = vmatpush.msra.mxu0 %v794
        %1537 = vmatpush.msra.mxu0 %v793
        %1538 = vmatpush.msra.mxu0 %v792
        %1539 = vmatmul.f32.gmra.mxu0 %v1507
        %v1540 = vpop.f32.mrf.mxu0
        %v1541 = vadd.f32 0.0, %v1540
        %1542 = vmatmul.f32.gmra.mxu0 %v1509
        %v1543 = vpop.f32.mrf.mxu0
        %v1544 = vadd.f32 0.0, %v1543
        %1545 = vmatmul.f32.gmra.mxu0 %v1511
        %v1546 = vpop.f32.mrf.mxu0
        %v1547 = vadd.f32 0.0, %v1546
        %1548 = vmatmul.f32.gmra.mxu0 %v1513
        %v1549 = vpop.f32.mrf.mxu0
        %v1550 = vadd.f32 0.0, %v1549
        %1551 = vmatmul.f32.gmra.mxu0 %v1515
        %v1552 = vpop.f32.mrf.mxu0
        %v1553 = vadd.f32 0.0, %v1552
        %1554 = vmatmul.f32.gmra.mxu0 %v1517
        %v1555 = vpop.f32.mrf.mxu0
        %v1556 = vadd.f32 0.0, %v1555
        %1557 = vmatmul.f32.gmra.mxu0 %v1519
        %v1558 = vpop.f32.mrf.mxu0
        %v1559 = vadd.f32 0.0, %v1558
        %1560 = vmatmul.f32.gmra.mxu0 %v1521
        %v1561 = vpop.f32.mrf.mxu0
        %v1562 = vadd.f32 0.0, %v1561
        %1563 = vdwg.mxu0
        %v1564 = vmul.f32 %v1541, %v860
        %v1565 = vmul.f32 %v1544, %v860
        %v1566 = vmul.f32 %v1547, %v860
        %v1567 = vmul.f32 %v1550, %v860
        %v1568 = vmul.f32 %v1553, %v860
        %v1569 = vmul.f32 %v1556, %v860
        %v1570 = vmul.f32 %v1559, %v860
        %v1571 = vmul.f32 %v1562, %v860
        %v1572 = vadd.f32 %v1564, %v871
        %v1573 = vadd.f32 %v1565, %v871
        %v1574 = vadd.f32 %v1566, %v871
        %v1575 = vadd.f32 %v1567, %v871
        %v1576 = vadd.f32 %v1568, %v871
        %v1577 = vadd.f32 %v1569, %v871
        %v1578 = vadd.f32 %v1570, %v871
        %v1579 = vadd.f32 %v1571, %v871
        %v1580 = vxor.u32 %v1572, 2147483648
        %v1581 = vxor.u32 %v1573, 2147483648
        %v1582 = vxor.u32 %v1574, 2147483648
        %v1583 = vxor.u32 %v1575, 2147483648
        %v1584 = vxor.u32 %v1576, 2147483648
        %v1585 = vxor.u32 %v1577, 2147483648
        %v1586 = vxor.u32 %v1578, 2147483648
        %v1587 = vxor.u32 %v1579, 2147483648
        %v1588 = vmul.f32 %v1580, 1.442695
        %v1589 = vpow.pop %v1588
        %v1590 = vmul.f32 %v1581, 1.442695
        %v1591 = vpow.pop %v1590
        %v1592 = vmul.f32 %v1582, 1.442695
        %v1593 = vpow.pop %v1592
        %v1594 = vmul.f32 %v1583, 1.442695
        %v1595 = vpow.pop %v1594
        %v1596 = vmul.f32 %v1584, 1.442695
        %v1597 = vpow.pop %v1596
        %v1598 = vmul.f32 %v1585, 1.442695
        %v1599 = vpow.pop %v1598
        %v1600 = vmul.f32 %v1586, 1.442695
        %v1601 = vpow.pop %v1600
        %v1602 = vmul.f32 %v1587, 1.442695
        %v1603 = vpow.pop %v1602
        %v1604 = vadd.f32 %v1589, 1.0
        %v1605 = vadd.f32 %v1591, 1.0
        %v1606 = vadd.f32 %v1593, 1.0
        %v1607 = vadd.f32 %v1595, 1.0
        %v1608 = vadd.f32 %v1597, 1.0
        %v1609 = vadd.f32 %v1599, 1.0
        %v1610 = vadd.f32 %v1601, 1.0
        %v1611 = vadd.f32 %v1603, 1.0
        %v1612 = vrcp.pop %v1604
        %v1613 = vmul.f32 %v1604, %v1612
        %v1614 = vsub.f32 1.0, %v1613
        %v1615 = vmul.f32 %v1612, %v1614
        %v1616 = vadd.f32 %v1612, %v1615
        %vm1617 = vweird.f32 %v1604
        %vm1618 = vweird.f32 %v1612
        %vm1619 = vmor %vm1617, %vm1618
        %v1620 = vsel %vm1619, %v1612, %v1616
        %v1621 = vand.u32 2147483647, %v1604
        %vm1622 = vcmp.eq.f32.partialorder %v1621, 8.507059e+37
        %v1623 = vand.u32 %v1604, 2147483648
        %v1624 = vor.u32 1.1754944e-38, %v1623
        %v1625 = vsel %vm1622, %v1624, %v1620
        %v1626 = vmul.f32 1.0, %v1625
        %v1627 = vrcp.pop %v1605
        %v1628 = vmul.f32 %v1605, %v1627
        %v1629 = vsub.f32 1.0, %v1628
        %v1630 = vmul.f32 %v1627, %v1629
        %v1631 = vadd.f32 %v1627, %v1630
        %vm1632 = vweird.f32 %v1605
        %vm1633 = vweird.f32 %v1627
        %vm1634 = vmor %vm1632, %vm1633
        %v1635 = vsel %vm1634, %v1627, %v1631
        %v1636 = vand.u32 2147483647, %v1605
        %vm1637 = vcmp.eq.f32.partialorder %v1636, 8.507059e+37
        %v1638 = vand.u32 %v1605, 2147483648
        %v1639 = vor.u32 1.1754944e-38, %v1638
        %v1640 = vsel %vm1637, %v1639, %v1635
        %v1641 = vmul.f32 1.0, %v1640
        %v1642 = vrcp.pop %v1606
        %v1643 = vmul.f32 %v1606, %v1642
        %v1644 = vsub.f32 1.0, %v1643
        %v1645 = vmul.f32 %v1642, %v1644
        %v1646 = vadd.f32 %v1642, %v1645
        %vm1647 = vweird.f32 %v1606
        %vm1648 = vweird.f32 %v1642
        %vm1649 = vmor %vm1647, %vm1648
        %v1650 = vsel %vm1649, %v1642, %v1646
        %v1651 = vand.u32 2147483647, %v1606
        %vm1652 = vcmp.eq.f32.partialorder %v1651, 8.507059e+37
        %v1653 = vand.u32 %v1606, 2147483648
        %v1654 = vor.u32 1.1754944e-38, %v1653
        %v1655 = vsel %vm1652, %v1654, %v1650
        %v1656 = vmul.f32 1.0, %v1655
        %v1657 = vrcp.pop %v1607
        %v1658 = vmul.f32 %v1607, %v1657
        %v1659 = vsub.f32 1.0, %v1658
        %v1660 = vmul.f32 %v1657, %v1659
        %v1661 = vadd.f32 %v1657, %v1660
        %vm1662 = vweird.f32 %v1607
        %vm1663 = vweird.f32 %v1657
        %vm1664 = vmor %vm1662, %vm1663
        %v1665 = vsel %vm1664, %v1657, %v1661
        %v1666 = vand.u32 2147483647, %v1607
        %vm1667 = vcmp.eq.f32.partialorder %v1666, 8.507059e+37
        %v1668 = vand.u32 %v1607, 2147483648
        %v1669 = vor.u32 1.1754944e-38, %v1668
        %v1670 = vsel %vm1667, %v1669, %v1665
        %v1671 = vmul.f32 1.0, %v1670
        %v1672 = vrcp.pop %v1608
        %v1673 = vmul.f32 %v1608, %v1672
        %v1674 = vsub.f32 1.0, %v1673
        %v1675 = vmul.f32 %v1672, %v1674
        %v1676 = vadd.f32 %v1672, %v1675
        %vm1677 = vweird.f32 %v1608
        %vm1678 = vweird.f32 %v1672
        %vm1679 = vmor %vm1677, %vm1678
        %v1680 = vsel %vm1679, %v1672, %v1676
        %v1681 = vand.u32 2147483647, %v1608
        %vm1682 = vcmp.eq.f32.partialorder %v1681, 8.507059e+37
        %v1683 = vand.u32 %v1608, 2147483648
        %v1684 = vor.u32 1.1754944e-38, %v1683
        %v1685 = vsel %vm1682, %v1684, %v1680
        %v1686 = vmul.f32 1.0, %v1685
        %v1687 = vrcp.pop %v1609
        %v1688 = vmul.f32 %v1609, %v1687
        %v1689 = vsub.f32 1.0, %v1688
        %v1690 = vmul.f32 %v1687, %v1689
        %v1691 = vadd.f32 %v1687, %v1690
        %vm1692 = vweird.f32 %v1609
        %vm1693 = vweird.f32 %v1687
        %vm1694 = vmor %vm1692, %vm1693
        %v1695 = vsel %vm1694, %v1687, %v1691
        %v1696 = vand.u32 2147483647, %v1609
        %vm1697 = vcmp.eq.f32.partialorder %v1696, 8.507059e+37
        %v1698 = vand.u32 %v1609, 2147483648
        %v1699 = vor.u32 1.1754944e-38, %v1698
        %v1700 = vsel %vm1697, %v1699, %v1695
        %v1701 = vmul.f32 1.0, %v1700
        %v1702 = vrcp.pop %v1610
        %v1703 = vmul.f32 %v1610, %v1702
        %v1704 = vsub.f32 1.0, %v1703
        %v1705 = vmul.f32 %v1702, %v1704
        %v1706 = vadd.f32 %v1702, %v1705
        %vm1707 = vweird.f32 %v1610
        %vm1708 = vweird.f32 %v1702
        %vm1709 = vmor %vm1707, %vm1708
        %v1710 = vsel %vm1709, %v1702, %v1706
        %v1711 = vand.u32 2147483647, %v1610
        %vm1712 = vcmp.eq.f32.partialorder %v1711, 8.507059e+37
        %v1713 = vand.u32 %v1610, 2147483648
        %v1714 = vor.u32 1.1754944e-38, %v1713
        %v1715 = vsel %vm1712, %v1714, %v1710
        %v1716 = vmul.f32 1.0, %v1715
        %v1717 = vrcp.pop %v1611
        %v1718 = vmul.f32 %v1611, %v1717
        %v1719 = vsub.f32 1.0, %v1718
        %v1720 = vmul.f32 %v1717, %v1719
        %v1721 = vadd.f32 %v1717, %v1720
        %vm1722 = vweird.f32 %v1611
        %vm1723 = vweird.f32 %v1717
        %vm1724 = vmor %vm1722, %vm1723
        %v1725 = vsel %vm1724, %v1717, %v1721
        %v1726 = vand.u32 2147483647, %v1611
        %vm1727 = vcmp.eq.f32.partialorder %v1726, 8.507059e+37
        %v1728 = vand.u32 %v1611, 2147483648
        %v1729 = vor.u32 1.1754944e-38, %v1728
        %v1730 = vsel %vm1727, %v1729, %v1725
        %v1731 = vmul.f32 1.0, %v1730
        %v1732 = vmul.f32 %v1572, %v1626
        %v1733 = vmul.f32 %v1573, %v1641
        %v1734 = vmul.f32 %v1574, %v1656
        %v1735 = vmul.f32 %v1575, %v1671
        %v1736 = vmul.f32 %v1576, %v1686
        %v1737 = vmul.f32 %v1577, %v1701
        %v1738 = vmul.f32 %v1578, %v1716
        %v1739 = vmul.f32 %v1579, %v1731
        %v1740 = vlaneseq
        %v1741 = vshrl.u32 %v1740, 7
        %v1742 = vadd.s32 %v1741, 8
        %v1743 = vadd.s32 %v1741, 16
        %v1744 = vadd.s32 %v1741, 24
        %v1745 = vadd.s32 %v1741, 32
        %v1746 = vadd.s32 %v1741, 40
        %v1747 = vadd.s32 %v1741, 48
        %v1748 = vadd.s32 %v1741, 56
        %vm1749 = vcmp.lt.s32.totalorder %v1741, 0
        %v1750 = vsub.s32 0, %v1741
        %v1751 = vsel %vm1749, %v1750, %v1741
        %v1752 = vshrl.u32 %v1751, 3
        %v1753 = vand.u32 %v1751, 7
        %v1754 = vsub.s32 0, %v1753
        %v1755 = vsel %vm1749, %v1754, %v1753
        %vm1756 = vcmp.lt.s32.totalorder %v1742, 0
        %v1757 = vsub.s32 0, %v1742
        %v1758 = vsel %vm1756, %v1757, %v1742
        %v1759 = vshrl.u32 %v1758, 3
        %v1760 = vand.u32 %v1758, 7
        %v1761 = vsub.s32 0, %v1760
        %v1762 = vsel %vm1756, %v1761, %v1760
        %vm1763 = vcmp.lt.s32.totalorder %v1743, 0
        %v1764 = vsub.s32 0, %v1743
        %v1765 = vsel %vm1763, %v1764, %v1743
        %v1766 = vshrl.u32 %v1765, 3
        %v1767 = vand.u32 %v1765, 7
        %v1768 = vsub.s32 0, %v1767
        %v1769 = vsel %vm1763, %v1768, %v1767
        %vm1770 = vcmp.lt.s32.totalorder %v1744, 0
        %v1771 = vsub.s32 0, %v1744
        %v1772 = vsel %vm1770, %v1771, %v1744
        %v1773 = vshrl.u32 %v1772, 3
        %v1774 = vand.u32 %v1772, 7
        %v1775 = vsub.s32 0, %v1774
        %v1776 = vsel %vm1770, %v1775, %v1774
        %vm1777 = vcmp.lt.s32.totalorder %v1745, 0
        %v1778 = vsub.s32 0, %v1745
        %v1779 = vsel %vm1777, %v1778, %v1745
        %v1780 = vshrl.u32 %v1779, 3
        %v1781 = vand.u32 %v1779, 7
        %v1782 = vsub.s32 0, %v1781
        %v1783 = vsel %vm1777, %v1782, %v1781
        %vm1784 = vcmp.lt.s32.totalorder %v1746, 0
        %v1785 = vsub.s32 0, %v1746
        %v1786 = vsel %vm1784, %v1785, %v1746
        %v1787 = vshrl.u32 %v1786, 3
        %v1788 = vand.u32 %v1786, 7
        %v1789 = vsub.s32 0, %v1788
        %v1790 = vsel %vm1784, %v1789, %v1788
        %vm1791 = vcmp.lt.s32.totalorder %v1747, 0
        %v1792 = vsub.s32 0, %v1747
        %v1793 = vsel %vm1791, %v1792, %v1747
        %v1794 = vshrl.u32 %v1793, 3
        %v1795 = vand.u32 %v1793, 7
        %v1796 = vsub.s32 0, %v1795
        %v1797 = vsel %vm1791, %v1796, %v1795
        %vm1798 = vcmp.lt.s32.totalorder %v1748, 0
        %v1799 = vsub.s32 0, %v1748
        %v1800 = vsel %vm1798, %v1799, %v1748
        %v1801 = vshrl.u32 %v1800, 3
        %v1802 = vand.u32 %v1800, 7
        %v1803 = vsub.s32 0, %v1802
        %v1804 = vsel %vm1798, %v1803, %v1802
        %vm1805 = vcmp.ne.s32.totalorder %v1755, 0
        %vm1806 = vcmp.ne.s32.totalorder %v1762, 0
        %vm1807 = vcmp.ne.s32.totalorder %v1769, 0
        %vm1808 = vcmp.ne.s32.totalorder %v1776, 0
        %vm1809 = vcmp.ne.s32.totalorder %v1783, 0
        %vm1810 = vcmp.ne.s32.totalorder %v1790, 0
        %vm1811 = vcmp.ne.s32.totalorder %v1797, 0
        %vm1812 = vcmp.ne.s32.totalorder %v1804, 0
        %vm1813 = vcmp.lt.s32.totalorder %v1755, 0
        %vm1814 = vcmp.lt.s32.totalorder %v1762, 0
        %vm1815 = vcmp.lt.s32.totalorder %v1769, 0
        %vm1816 = vcmp.lt.s32.totalorder %v1776, 0
        %vm1817 = vcmp.lt.s32.totalorder %v1783, 0
        %vm1818 = vcmp.lt.s32.totalorder %v1790, 0
        %vm1819 = vcmp.lt.s32.totalorder %v1797, 0
        %vm1820 = vcmp.lt.s32.totalorder %v1804, 0
        %vm1821 = vmand %vm1813, %vm1805
        %vm1822 = vmand %vm1814, %vm1806
        %vm1823 = vmand %vm1815, %vm1807
        %vm1824 = vmand %vm1816, %vm1808
        %vm1825 = vmand %vm1817, %vm1809
        %vm1826 = vmand %vm1818, %vm1810
        %vm1827 = vmand %vm1819, %vm1811
        %vm1828 = vmand %vm1820, %vm1812
        %v1829 = vadd.s32 %v1755, 8
        %v1830 = vadd.s32 %v1762, 8
        %v1831 = vadd.s32 %v1769, 8
        %v1832 = vadd.s32 %v1776, 8
        %v1833 = vadd.s32 %v1783, 8
        %v1834 = vadd.s32 %v1790, 8
        %v1835 = vadd.s32 %v1797, 8
        %v1836 = vadd.s32 %v1804, 8
        %v1837 = vsel %vm1821, %v1829, %v1755
        %v1838 = vsel %vm1822, %v1830, %v1762
        %v1839 = vsel %vm1823, %v1831, %v1769
        %v1840 = vsel %vm1824, %v1832, %v1776
        %v1841 = vsel %vm1825, %v1833, %v1783
        %v1842 = vsel %vm1826, %v1834, %v1790
        %v1843 = vsel %vm1827, %v1835, %v1797
        %v1844 = vsel %vm1828, %v1836, %v1804
        %vm1845 = vcmp.eq.s32.totalorder %v1837, 0
        %vm1846 = vcmp.eq.s32.totalorder %v1838, 0
        %vm1847 = vcmp.eq.s32.totalorder %v1839, 0
        %vm1848 = vcmp.eq.s32.totalorder %v1840, 0
        %vm1849 = vcmp.eq.s32.totalorder %v1841, 0
        %vm1850 = vcmp.eq.s32.totalorder %v1842, 0
        %vm1851 = vcmp.eq.s32.totalorder %v1843, 0
        %vm1852 = vcmp.eq.s32.totalorder %v1844, 0
        %vm1861 = vcmask 1040384
        %v1862 = vrot.slane %v1266, 7
        %v1863 = vrot.slane %v1267, 7
        %v1864 = vsel %vm1861, %v1862, %v1863
        %v1865 = vrot.slane %v1268, 7
        %v1866 = vsel %vm1861, %v1863, %v1865
        %v1867 = vrot.slane %v1269, 7
        %v1868 = vsel %vm1861, %v1865, %v1867
        %v1869 = vrot.slane %v1270, 7
        %v1870 = vsel %vm1861, %v1867, %v1869
        %v1871 = vrot.slane %v1271, 7
        %v1872 = vsel %vm1861, %v1869, %v1871
        %v1873 = vrot.slane %v1272, 7
        %v1874 = vsel %vm1861, %v1871, %v1873
        %v1875 = vrot.slane %v1273, 7
        %v1876 = vsel %vm1861, %v1873, %v1875
        %v1885 = vsel %vm1861, 0.0, %v1862
        %v1886 = vsel %vm1845, 0.0, %v1885
        %v1887 = vsel %vm1846, 0.0, %v1864
        %v1888 = vsel %vm1847, 0.0, %v1866
        %v1889 = vsel %vm1848, 0.0, %v1868
        %v1890 = vsel %vm1849, 0.0, %v1870
        %v1891 = vsel %vm1850, 0.0, %v1872
        %v1892 = vsel %vm1851, 0.0, %v1874
        %v1893 = vsel %vm1852, 0.0, %v1876
        %v1902 = vrot.slane %v1732, 7
        %v1903 = vrot.slane %v1733, 7
        %v1904 = vsel %vm1861, %v1902, %v1903
        %v1905 = vrot.slane %v1734, 7
        %v1906 = vsel %vm1861, %v1903, %v1905
        %v1907 = vrot.slane %v1735, 7
        %v1908 = vsel %vm1861, %v1905, %v1907
        %v1909 = vrot.slane %v1736, 7
        %v1910 = vsel %vm1861, %v1907, %v1909
        %v1911 = vrot.slane %v1737, 7
        %v1912 = vsel %vm1861, %v1909, %v1911
        %v1913 = vrot.slane %v1738, 7
        %v1914 = vsel %vm1861, %v1911, %v1913
        %v1915 = vrot.slane %v1739, 7
        %v1916 = vsel %vm1861, %v1913, %v1915
        %v1925 = vsel %vm1861, 0.0, %v1902
        %v1926 = vsel %vm1845, 0.0, %v1925
        %v1927 = vsel %vm1846, 0.0, %v1904
        %v1928 = vsel %vm1847, 0.0, %v1906
        %v1929 = vsel %vm1848, 0.0, %v1908
        %v1930 = vsel %vm1849, 0.0, %v1910
        %v1931 = vsel %vm1850, 0.0, %v1912
        %v1932 = vsel %vm1851, 0.0, %v1914
        %v1933 = vsel %vm1852, 0.0, %v1916
        %v1934 = vld [vmem:[#allocation8] sm:$0xff]
        %v1935 = vld [vmem:[#allocation8 + $0x8] sm:$0xff]
        %v1936 = vld [vmem:[#allocation8 + $0x10] sm:$0xff]
        %v1937 = vld [vmem:[#allocation8 + $0x18] sm:$0xff]
        %v1938 = vld [vmem:[#allocation8 + $0x20] sm:$0xff]
        %v1939 = vld [vmem:[#allocation8 + $0x28] sm:$0xff]
        %v1940 = vld [vmem:[#allocation8 + $0x30] sm:$0xff]
        %v1941 = vld [vmem:[#allocation8 + $0x38] sm:$0xff]
        %s1942 = scalar_lea.vmem [#allocation8], 64
        %v1943 = vld [vmem:[%s1942] sm:$0xff]
        %v1944 = vld [vmem:[%s1942 + $0x8] sm:$0xff]
        %v1945 = vld [vmem:[%s1942 + $0x10] sm:$0xff]
        %v1946 = vld [vmem:[%s1942 + $0x18] sm:$0xff]
        %v1947 = vld [vmem:[%s1942 + $0x20] sm:$0xff]
        %v1948 = vld [vmem:[%s1942 + $0x28] sm:$0xff]
        %v1949 = vld [vmem:[%s1942 + $0x30] sm:$0xff]
        %v1950 = vld [vmem:[%s1942 + $0x38] sm:$0xff]
        %v1952 = vsel %vm542, 0.0, 0
        %v1955 = vsel %vm542, %v1499, 0
        %v1958 = vsel %vm542, %v1500, 0
        %v1961 = vsel %vm542, %v1501, 0
        %v1964 = vsel %vm542, %v1502, 0
        %v1967 = vsel %vm542, %v1503, 0
        %v1970 = vsel %vm542, %v1504, 0
        %v1973 = vsel %vm542, %v1505, 0
        %1975 = vmatpush.msra.mxu0 0.0
        %1976 = vmatpush.msra.mxu0 0.0
        %1977 = vmatpush.msra.mxu0 0.0
        %1978 = vmatpush.msra.mxu0 0.0
        %1979 = vmatpush.msra.mxu0 0.0
        %1980 = vmatpush.msra.mxu0 0.0
        %1981 = vmatpush.msra.mxu0 0.0
        %1982 = vmatpush.msra.mxu0 0.0
        %1983 = vmatpush.msra.mxu0 %v1950
        %1984 = vmatpush.msra.mxu0 %v1949
        %1985 = vmatpush.msra.mxu0 %v1948
        %1986 = vmatpush.msra.mxu0 %v1947
        %1987 = vmatpush.msra.mxu0 %v1946
        %1988 = vmatpush.msra.mxu0 %v1945
        %1989 = vmatpush.msra.mxu0 %v1944
        %1990 = vmatpush.msra.mxu0 %v1943
        %1991 = vmatmul.f32.gmra.mxu0 %v1952
        %v1992 = vpop.f32.mrf.mxu0
        %v1993 = vadd.f32 0.0, %v1992
        %1994 = vmatmul.f32.gmra.mxu0 %v1955
        %v1995 = vpop.f32.mrf.mxu0
        %v1996 = vadd.f32 0.0, %v1995
        %1997 = vmatmul.f32.gmra.mxu0 %v1958
        %v1998 = vpop.f32.mrf.mxu0
        %v1999 = vadd.f32 0.0, %v1998
        %2000 = vmatmul.f32.gmra.mxu0 %v1961
        %v2001 = vpop.f32.mrf.mxu0
        %v2002 = vadd.f32 0.0, %v2001
        %2003 = vmatmul.f32.gmra.mxu0 %v1964
        %v2004 = vpop.f32.mrf.mxu0
        %v2005 = vadd.f32 0.0, %v2004
        %2006 = vmatmul.f32.gmra.mxu0 %v1967
        %v2007 = vpop.f32.mrf.mxu0
        %v2008 = vadd.f32 0.0, %v2007
        %2009 = vmatmul.f32.gmra.mxu0 %v1970
        %v2010 = vpop.f32.mrf.mxu0
        %v2011 = vadd.f32 0.0, %v2010
        %2012 = vmatmul.f32.gmra.mxu0 %v1973
        %v2013 = vpop.f32.mrf.mxu0
        %v2014 = vadd.f32 0.0, %v2013
        %2015 = vdwg.mxu0
        %v2017 = vsel %vm542, %v1926, 0
        %v2020 = vsel %vm542, %v1927, 0
        %v2023 = vsel %vm542, %v1928, 0
        %v2026 = vsel %vm542, %v1929, 0
        %v2029 = vsel %vm542, %v1930, 0
        %v2032 = vsel %vm542, %v1931, 0
        %v2035 = vsel %vm542, %v1932, 0
        %2037 = vmatpush.msra.mxu0 0.0
        %2038 = vmatpush.msra.mxu0 0.0
        %2039 = vmatpush.msra.mxu0 0.0
        %2040 = vmatpush.msra.mxu0 0.0
        %2041 = vmatpush.msra.mxu0 0.0
        %2042 = vmatpush.msra.mxu0 0.0
        %2043 = vmatpush.msra.mxu0 0.0
        %2044 = vmatpush.msra.mxu0 0.0
        %2045 = vmatpush.msra.mxu0 %v1941
        %2046 = vmatpush.msra.mxu0 %v1940
        %2047 = vmatpush.msra.mxu0 %v1939
        %2048 = vmatpush.msra.mxu0 %v1938
        %2049 = vmatpush.msra.mxu0 %v1937
        %2050 = vmatpush.msra.mxu0 %v1936
        %2051 = vmatpush.msra.mxu0 %v1935
        %2052 = vmatpush.msra.mxu0 %v1934
        %2053 = vmatmul.f32.gmra.mxu0 %v1952
        %v2054 = vpop.f32.mrf.mxu0
        %v2055 = vadd.f32 %v1993, %v2054
        %2056 = vmatmul.f32.gmra.mxu0 %v2017
        %v2057 = vpop.f32.mrf.mxu0
        %v2058 = vadd.f32 %v1996, %v2057
        %2059 = vmatmul.f32.gmra.mxu0 %v2020
        %v2060 = vpop.f32.mrf.mxu0
        %v2061 = vadd.f32 %v1999, %v2060
        %2062 = vmatmul.f32.gmra.mxu0 %v2023
        %v2063 = vpop.f32.mrf.mxu0
        %v2064 = vadd.f32 %v2002, %v2063
        %2065 = vmatmul.f32.gmra.mxu0 %v2026
        %v2066 = vpop.f32.mrf.mxu0
        %v2067 = vadd.f32 %v2005, %v2066
        %2068 = vmatmul.f32.gmra.mxu0 %v2029
        %v2069 = vpop.f32.mrf.mxu0
        %v2070 = vadd.f32 %v2008, %v2069
        %2071 = vmatmul.f32.gmra.mxu0 %v2032
        %v2072 = vpop.f32.mrf.mxu0
        %v2073 = vadd.f32 %v2011, %v2072
        %2074 = vmatmul.f32.gmra.mxu0 %v2035
        %v2075 = vpop.f32.mrf.mxu0
        %v2076 = vadd.f32 %v2014, %v2075
        %2077 = vdwg.mxu0
        %s2078 = scalar_lea.vmem [#allocation8], 128
        %v2079 = vld [vmem:[%s2078] sm:$0xff]
        %v2080 = vld [vmem:[%s2078 + $0x8] sm:$0xff]
        %v2081 = vld [vmem:[%s2078 + $0x10] sm:$0xff]
        %v2082 = vld [vmem:[%s2078 + $0x18] sm:$0xff]
        %v2083 = vld [vmem:[%s2078 + $0x20] sm:$0xff]
        %v2084 = vld [vmem:[%s2078 + $0x28] sm:$0xff]
        %v2085 = vld [vmem:[%s2078 + $0x30] sm:$0xff]
        %v2086 = vld [vmem:[%s2078 + $0x38] sm:$0xff]
        %v2087 = vsel %vm542, %v1732, 0
        %v2089 = vsel %vm542, %v1733, 0
        %v2091 = vsel %vm542, %v1734, 0
        %v2093 = vsel %vm542, %v1735, 0
        %v2095 = vsel %vm542, %v1736, 0
        %v2097 = vsel %vm542, %v1737, 0
        %v2099 = vsel %vm542, %v1738, 0
        %2101 = vmatpush.msra.mxu0 0.0
        %2102 = vmatpush.msra.mxu0 0.0
        %2103 = vmatpush.msra.mxu0 0.0
        %2104 = vmatpush.msra.mxu0 0.0
        %2105 = vmatpush.msra.mxu0 0.0
        %2106 = vmatpush.msra.mxu0 0.0
        %2107 = vmatpush.msra.mxu0 0.0
        %2108 = vmatpush.msra.mxu0 0.0
        %2109 = vmatpush.msra.mxu0 %v2086
        %2110 = vmatpush.msra.mxu0 %v2085
        %2111 = vmatpush.msra.mxu0 %v2084
        %2112 = vmatpush.msra.mxu0 %v2083
        %2113 = vmatpush.msra.mxu0 %v2082
        %2114 = vmatpush.msra.mxu0 %v2081
        %2115 = vmatpush.msra.mxu0 %v2080
        %2116 = vmatpush.msra.mxu0 %v2079
        %2117 = vmatmul.f32.gmra.mxu0 %v1952
        %v2118 = vpop.f32.mrf.mxu0
        %v2119 = vadd.f32 0.0, %v2118
        %2120 = vmatmul.f32.gmra.mxu0 %v2087
        %v2121 = vpop.f32.mrf.mxu0
        %v2122 = vadd.f32 0.0, %v2121
        %2123 = vmatmul.f32.gmra.mxu0 %v2089
        %v2124 = vpop.f32.mrf.mxu0
        %v2125 = vadd.f32 0.0, %v2124
        %2126 = vmatmul.f32.gmra.mxu0 %v2091
        %v2127 = vpop.f32.mrf.mxu0
        %v2128 = vadd.f32 0.0, %v2127
        %2129 = vmatmul.f32.gmra.mxu0 %v2093
        %v2130 = vpop.f32.mrf.mxu0
        %v2131 = vadd.f32 0.0, %v2130
        %2132 = vmatmul.f32.gmra.mxu0 %v2095
        %v2133 = vpop.f32.mrf.mxu0
        %v2134 = vadd.f32 0.0, %v2133
        %2135 = vmatmul.f32.gmra.mxu0 %v2097
        %v2136 = vpop.f32.mrf.mxu0
        %v2137 = vadd.f32 0.0, %v2136
        %2138 = vmatmul.f32.gmra.mxu0 %v2099
        %v2139 = vpop.f32.mrf.mxu0
        %v2140 = vadd.f32 0.0, %v2139
        %2141 = vdwg.mxu0
        %v2142 = vadd.f32 %v2055, %v2119
        %v2143 = vadd.f32 %v2058, %v2122
        %v2144 = vadd.f32 %v2061, %v2125
        %v2145 = vadd.f32 %v2064, %v2128
        %v2146 = vadd.f32 %v2067, %v2131
        %v2147 = vadd.f32 %v2070, %v2134
        %v2148 = vadd.f32 %v2073, %v2137
        %v2149 = vadd.f32 %v2076, %v2140
        %s2150 = scalar_lea.vmem [#allocation8], 192
        %v2151 = vld [vmem:[%s2150] sm:$0xff]
        %v2152 = vld [vmem:[%s2150 + $0x8] sm:$0xff]
        %v2153 = vld [vmem:[%s2150 + $0x10] sm:$0xff]
        %v2154 = vld [vmem:[%s2150 + $0x18] sm:$0xff]
        %v2155 = vld [vmem:[%s2150 + $0x20] sm:$0xff]
        %v2156 = vld [vmem:[%s2150 + $0x28] sm:$0xff]
        %v2157 = vld [vmem:[%s2150 + $0x30] sm:$0xff]
        %v2158 = vld [vmem:[%s2150 + $0x38] sm:$0xff]
        %v2160 = vsel %vm542, %v1886, 0
        %v2163 = vsel %vm542, %v1887, 0
        %v2166 = vsel %vm542, %v1888, 0
        %v2169 = vsel %vm542, %v1889, 0
        %v2172 = vsel %vm542, %v1890, 0
        %v2175 = vsel %vm542, %v1891, 0
        %v2178 = vsel %vm542, %v1892, 0
        %v2181 = vsel %vm542, %v1893, 0
        %2183 = vmatpush.msra.mxu0 0.0
        %2184 = vmatpush.msra.mxu0 0.0
        %2185 = vmatpush.msra.mxu0 0.0
        %2186 = vmatpush.msra.mxu0 0.0
        %2187 = vmatpush.msra.mxu0 0.0
        %2188 = vmatpush.msra.mxu0 0.0
        %2189 = vmatpush.msra.mxu0 0.0
        %2190 = vmatpush.msra.mxu0 0.0
        %2191 = vmatpush.msra.mxu0 %v2158
        %2192 = vmatpush.msra.mxu0 %v2157
        %2193 = vmatpush.msra.mxu0 %v2156
        %2194 = vmatpush.msra.mxu0 %v2155
        %2195 = vmatpush.msra.mxu0 %v2154
        %2196 = vmatpush.msra.mxu0 %v2153
        %2197 = vmatpush.msra.mxu0 %v2152
        %2198 = vmatpush.msra.mxu0 %v2151
        %2199 = vmatmul.f32.gmra.mxu0 %v2160
        %v2200 = vpop.f32.mrf.mxu0
        %v2201 = vadd.f32 0.0, %v2200
        %2202 = vmatmul.f32.gmra.mxu0 %v2163
        %v2203 = vpop.f32.mrf.mxu0
        %v2204 = vadd.f32 0.0, %v2203
        %2205 = vmatmul.f32.gmra.mxu0 %v2166
        %v2206 = vpop.f32.mrf.mxu0
        %v2207 = vadd.f32 0.0, %v2206
        %2208 = vmatmul.f32.gmra.mxu0 %v2169
        %v2209 = vpop.f32.mrf.mxu0
        %v2210 = vadd.f32 0.0, %v2209
        %2211 = vmatmul.f32.gmra.mxu0 %v2172
        %v2212 = vpop.f32.mrf.mxu0
        %v2213 = vadd.f32 0.0, %v2212
        %2214 = vmatmul.f32.gmra.mxu0 %v2175
        %v2215 = vpop.f32.mrf.mxu0
        %v2216 = vadd.f32 0.0, %v2215
        %2217 = vmatmul.f32.gmra.mxu0 %v2178
        %v2218 = vpop.f32.mrf.mxu0
        %v2219 = vadd.f32 0.0, %v2218
        %2220 = vmatmul.f32.gmra.mxu0 %v2181
        %v2221 = vpop.f32.mrf.mxu0
        %v2222 = vadd.f32 0.0, %v2221
        %2223 = vdwg.mxu0
        %v2224 = vadd.f32 %v2142, %v2201
        %v2225 = vadd.f32 %v2143, %v2204
        %v2226 = vadd.f32 %v2144, %v2207
        %v2227 = vadd.f32 %v2145, %v2210
        %v2228 = vadd.f32 %v2146, %v2213
        %v2229 = vadd.f32 %v2147, %v2216
        %v2230 = vadd.f32 %v2148, %v2219
        %v2231 = vadd.f32 %v2149, %v2222
        %s2232 = scalar_lea.vmem [#allocation8], 256
        %v2233 = vld [vmem:[%s2232] sm:$0xff]
        %v2234 = vld [vmem:[%s2232 + $0x8] sm:$0xff]
        %v2235 = vld [vmem:[%s2232 + $0x10] sm:$0xff]
        %v2236 = vld [vmem:[%s2232 + $0x18] sm:$0xff]
        %v2237 = vld [vmem:[%s2232 + $0x20] sm:$0xff]
        %v2238 = vld [vmem:[%s2232 + $0x28] sm:$0xff]
        %v2239 = vld [vmem:[%s2232 + $0x30] sm:$0xff]
        %v2240 = vld [vmem:[%s2232 + $0x38] sm:$0xff]
        %v2242 = vsel %vm542, %v1033, 0
        %v2245 = vsel %vm542, %v1034, 0
        %v2248 = vsel %vm542, %v1035, 0
        %v2251 = vsel %vm542, %v1036, 0
        %v2254 = vsel %vm542, %v1037, 0
        %v2257 = vsel %vm542, %v1038, 0
        %v2260 = vsel %vm542, %v1039, 0
        %v2263 = vsel %vm542, %v1040, 0
        %2265 = vmatpush.msra.mxu0 0.0
        %2266 = vmatpush.msra.mxu0 0.0
        %2267 = vmatpush.msra.mxu0 0.0
        %2268 = vmatpush.msra.mxu0 0.0
        %2269 = vmatpush.msra.mxu0 0.0
        %2270 = vmatpush.msra.mxu0 0.0
        %2271 = vmatpush.msra.mxu0 0.0
        %2272 = vmatpush.msra.mxu0 0.0
        %2273 = vmatpush.msra.mxu0 %v2240
        %2274 = vmatpush.msra.mxu0 %v2239
        %2275 = vmatpush.msra.mxu0 %v2238
        %2276 = vmatpush.msra.mxu0 %v2237
        %2277 = vmatpush.msra.mxu0 %v2236
        %2278 = vmatpush.msra.mxu0 %v2235
        %2279 = vmatpush.msra.mxu0 %v2234
        %2280 = vmatpush.msra.mxu0 %v2233
        %2281 = vmatmul.f32.gmra.mxu0 %v2242
        %v2282 = vpop.f32.mrf.mxu0
        %v2283 = vadd.f32 0.0, %v2282
        %2284 = vmatmul.f32.gmra.mxu0 %v2245
        %v2285 = vpop.f32.mrf.mxu0
        %v2286 = vadd.f32 0.0, %v2285
        %2287 = vmatmul.f32.gmra.mxu0 %v2248
        %v2288 = vpop.f32.mrf.mxu0
        %v2289 = vadd.f32 0.0, %v2288
        %2290 = vmatmul.f32.gmra.mxu0 %v2251
        %v2291 = vpop.f32.mrf.mxu0
        %v2292 = vadd.f32 0.0, %v2291
        %2293 = vmatmul.f32.gmra.mxu0 %v2254
        %v2294 = vpop.f32.mrf.mxu0
        %v2295 = vadd.f32 0.0, %v2294
        %2296 = vmatmul.f32.gmra.mxu0 %v2257
        %v2297 = vpop.f32.mrf.mxu0
        %v2298 = vadd.f32 0.0, %v2297
        %2299 = vmatmul.f32.gmra.mxu0 %v2260
        %v2300 = vpop.f32.mrf.mxu0
        %v2301 = vadd.f32 0.0, %v2300
        %2302 = vmatmul.f32.gmra.mxu0 %v2263
        %v2303 = vpop.f32.mrf.mxu0
        %v2304 = vadd.f32 0.0, %v2303
        %2305 = vdwg.mxu0
        %v2306 = vadd.f32 %v2224, %v2283
        %v2307 = vadd.f32 %v2225, %v2286
        %v2308 = vadd.f32 %v2226, %v2289
        %v2309 = vadd.f32 %v2227, %v2292
        %v2310 = vadd.f32 %v2228, %v2295
        %v2311 = vadd.f32 %v2229, %v2298
        %v2312 = vadd.f32 %v2230, %v2301
        %v2313 = vadd.f32 %v2231, %v2304
        %s2314 = scalar_lea.vmem [#allocation8], 320
        %v2315 = vld [vmem:[%s2314] sm:$0xff]
        %v2316 = vld [vmem:[%s2314 + $0x8] sm:$0xff]
        %v2317 = vld [vmem:[%s2314 + $0x10] sm:$0xff]
        %v2318 = vld [vmem:[%s2314 + $0x18] sm:$0xff]
        %v2319 = vld [vmem:[%s2314 + $0x20] sm:$0xff]
        %v2320 = vld [vmem:[%s2314 + $0x28] sm:$0xff]
        %v2321 = vld [vmem:[%s2314 + $0x30] sm:$0xff]
        %v2322 = vld [vmem:[%s2314 + $0x38] sm:$0xff]
        %v2323 = vsel %vm542, %v1266, 0
        %v2325 = vsel %vm542, %v1267, 0
        %v2327 = vsel %vm542, %v1268, 0
        %v2329 = vsel %vm542, %v1269, 0
        %v2331 = vsel %vm542, %v1270, 0
        %v2333 = vsel %vm542, %v1271, 0
        %v2335 = vsel %vm542, %v1272, 0
        %v2337 = vsel %vm542, %v1273, 0
        %2339 = vmatpush.msra.mxu0 0.0
        %2340 = vmatpush.msra.mxu0 0.0
        %2341 = vmatpush.msra.mxu0 0.0
        %2342 = vmatpush.msra.mxu0 0.0
        %2343 = vmatpush.msra.mxu0 0.0
        %2344 = vmatpush.msra.mxu0 0.0
        %2345 = vmatpush.msra.mxu0 0.0
        %2346 = vmatpush.msra.mxu0 0.0
        %2347 = vmatpush.msra.mxu0 %v2322
        %2348 = vmatpush.msra.mxu0 %v2321
        %2349 = vmatpush.msra.mxu0 %v2320
        %2350 = vmatpush.msra.mxu0 %v2319
        %2351 = vmatpush.msra.mxu0 %v2318
        %2352 = vmatpush.msra.mxu0 %v2317
        %2353 = vmatpush.msra.mxu0 %v2316
        %2354 = vmatpush.msra.mxu0 %v2315
        %2355 = vmatmul.f32.gmra.mxu0 %v2323
        %v2356 = vpop.f32.mrf.mxu0
        %v2357 = vadd.f32 0.0, %v2356
        %2358 = vmatmul.f32.gmra.mxu0 %v2325
        %v2359 = vpop.f32.mrf.mxu0
        %v2360 = vadd.f32 0.0, %v2359
        %2361 = vmatmul.f32.gmra.mxu0 %v2327
        %v2362 = vpop.f32.mrf.mxu0
        %v2363 = vadd.f32 0.0, %v2362
        %2364 = vmatmul.f32.gmra.mxu0 %v2329
        %v2365 = vpop.f32.mrf.mxu0
        %v2366 = vadd.f32 0.0, %v2365
        %2367 = vmatmul.f32.gmra.mxu0 %v2331
        %v2368 = vpop.f32.mrf.mxu0
        %v2369 = vadd.f32 0.0, %v2368
        %2370 = vmatmul.f32.gmra.mxu0 %v2333
        %v2371 = vpop.f32.mrf.mxu0
        %v2372 = vadd.f32 0.0, %v2371
        %2373 = vmatmul.f32.gmra.mxu0 %v2335
        %v2374 = vpop.f32.mrf.mxu0
        %v2375 = vadd.f32 0.0, %v2374
        %2376 = vmatmul.f32.gmra.mxu0 %v2337
        %v2377 = vpop.f32.mrf.mxu0
        %v2378 = vadd.f32 0.0, %v2377
        %2379 = vdwg.mxu0
        %v2380 = vadd.f32 %v2306, %v2357
        %v2381 = vadd.f32 %v2307, %v2360
        %v2382 = vadd.f32 %v2308, %v2363
        %v2383 = vadd.f32 %v2309, %v2366
        %v2384 = vadd.f32 %v2310, %v2369
        %v2385 = vadd.f32 %v2311, %v2372
        %v2386 = vadd.f32 %v2312, %v2375
        %v2387 = vadd.f32 %v2313, %v2378
        %s2388 = scalar_lea.vmem [#allocation8], 384
        %v2389 = vld [vmem:[%s2388] sm:$0xff]
        %v2390 = vld [vmem:[%s2388 + $0x8] sm:$0xff]
        %v2391 = vld [vmem:[%s2388 + $0x10] sm:$0xff]
        %v2392 = vld [vmem:[%s2388 + $0x18] sm:$0xff]
        %v2393 = vld [vmem:[%s2388 + $0x20] sm:$0xff]
        %v2394 = vld [vmem:[%s2388 + $0x28] sm:$0xff]
        %v2395 = vld [vmem:[%s2388 + $0x30] sm:$0xff]
        %v2396 = vld [vmem:[%s2388 + $0x38] sm:$0xff]
        %v2398 = vsel %vm542, %v1933, 0
        %2400 = vmatpush.msra.mxu0 0.0
        %2401 = vmatpush.msra.mxu0 0.0
        %2402 = vmatpush.msra.mxu0 0.0
        %2403 = vmatpush.msra.mxu0 0.0
        %2404 = vmatpush.msra.mxu0 0.0
        %2405 = vmatpush.msra.mxu0 0.0
        %2406 = vmatpush.msra.mxu0 0.0
        %2407 = vmatpush.msra.mxu0 0.0
        %2408 = vmatpush.msra.mxu0 %v2396
        %2409 = vmatpush.msra.mxu0 %v2395
        %2410 = vmatpush.msra.mxu0 %v2394
        %2411 = vmatpush.msra.mxu0 %v2393
        %2412 = vmatpush.msra.mxu0 %v2392
        %2413 = vmatpush.msra.mxu0 %v2391
        %2414 = vmatpush.msra.mxu0 %v2390
        %2415 = vmatpush.msra.mxu0 %v2389
        %2416 = vmatmul.f32.gmra.mxu0 %v2017
        %v2417 = vpop.f32.mrf.mxu0
        %v2418 = vadd.f32 0.0, %v2417
        %2419 = vmatmul.f32.gmra.mxu0 %v2020
        %v2420 = vpop.f32.mrf.mxu0
        %v2421 = vadd.f32 0.0, %v2420
        %2422 = vmatmul.f32.gmra.mxu0 %v2023
        %v2423 = vpop.f32.mrf.mxu0
        %v2424 = vadd.f32 0.0, %v2423
        %2425 = vmatmul.f32.gmra.mxu0 %v2026
        %v2426 = vpop.f32.mrf.mxu0
        %v2427 = vadd.f32 0.0, %v2426
        %2428 = vmatmul.f32.gmra.mxu0 %v2029
        %v2429 = vpop.f32.mrf.mxu0
        %v2430 = vadd.f32 0.0, %v2429
        %2431 = vmatmul.f32.gmra.mxu0 %v2032
        %v2432 = vpop.f32.mrf.mxu0
        %v2433 = vadd.f32 0.0, %v2432
        %2434 = vmatmul.f32.gmra.mxu0 %v2035
        %v2435 = vpop.f32.mrf.mxu0
        %v2436 = vadd.f32 0.0, %v2435
        %2437 = vmatmul.f32.gmra.mxu0 %v2398
        %v2438 = vpop.f32.mrf.mxu0
        %v2439 = vadd.f32 0.0, %v2438
        %2440 = vdwg.mxu0
        %v2441 = vadd.f32 %v2380, %v2418
        %v2442 = vadd.f32 %v2381, %v2421
        %v2443 = vadd.f32 %v2382, %v2424
        %v2444 = vadd.f32 %v2383, %v2427
        %v2445 = vadd.f32 %v2384, %v2430
        %v2446 = vadd.f32 %v2385, %v2433
        %v2447 = vadd.f32 %v2386, %v2436
        %v2448 = vadd.f32 %v2387, %v2439
        %s2449 = scalar_lea.vmem [#allocation8], 448
        %v2450 = vld [vmem:[%s2449] sm:$0xff]
        %v2451 = vld [vmem:[%s2449 + $0x8] sm:$0xff]
        %v2452 = vld [vmem:[%s2449 + $0x10] sm:$0xff]
        %v2453 = vld [vmem:[%s2449 + $0x18] sm:$0xff]
        %v2454 = vld [vmem:[%s2449 + $0x20] sm:$0xff]
        %v2455 = vld [vmem:[%s2449 + $0x28] sm:$0xff]
        %v2456 = vld [vmem:[%s2449 + $0x30] sm:$0xff]
        %v2457 = vld [vmem:[%s2449 + $0x38] sm:$0xff]
        %v2459 = vsel %vm542, %v1506, 0
        %2461 = vmatpush.msra.mxu0 0.0
        %2462 = vmatpush.msra.mxu0 0.0
        %2463 = vmatpush.msra.mxu0 0.0
        %2464 = vmatpush.msra.mxu0 0.0
        %2465 = vmatpush.msra.mxu0 0.0
        %2466 = vmatpush.msra.mxu0 0.0
        %2467 = vmatpush.msra.mxu0 0.0
        %2468 = vmatpush.msra.mxu0 0.0
        %2469 = vmatpush.msra.mxu0 %v2457
        %2470 = vmatpush.msra.mxu0 %v2456
        %2471 = vmatpush.msra.mxu0 %v2455
        %2472 = vmatpush.msra.mxu0 %v2454
        %2473 = vmatpush.msra.mxu0 %v2453
        %2474 = vmatpush.msra.mxu0 %v2452
        %2475 = vmatpush.msra.mxu0 %v2451
        %2476 = vmatpush.msra.mxu0 %v2450
        %2477 = vmatmul.f32.gmra.mxu0 %v1955
        %v2478 = vpop.f32.mrf.mxu0
        %v2479 = vadd.f32 0.0, %v2478
        %2480 = vmatmul.f32.gmra.mxu0 %v1958
        %v2481 = vpop.f32.mrf.mxu0
        %v2482 = vadd.f32 0.0, %v2481
        %2483 = vmatmul.f32.gmra.mxu0 %v1961
        %v2484 = vpop.f32.mrf.mxu0
        %v2485 = vadd.f32 0.0, %v2484
        %2486 = vmatmul.f32.gmra.mxu0 %v1964
        %v2487 = vpop.f32.mrf.mxu0
        %v2488 = vadd.f32 0.0, %v2487
        %2489 = vmatmul.f32.gmra.mxu0 %v1967
        %v2490 = vpop.f32.mrf.mxu0
        %v2491 = vadd.f32 0.0, %v2490
        %2492 = vmatmul.f32.gmra.mxu0 %v1970
        %v2493 = vpop.f32.mrf.mxu0
        %v2494 = vadd.f32 0.0, %v2493
        %2495 = vmatmul.f32.gmra.mxu0 %v1973
        %v2496 = vpop.f32.mrf.mxu0
        %v2497 = vadd.f32 0.0, %v2496
        %2498 = vmatmul.f32.gmra.mxu0 %v2459
        %v2499 = vpop.f32.mrf.mxu0
        %v2500 = vadd.f32 0.0, %v2499
        %2501 = vdwg.mxu0
        %v2502 = vadd.f32 %v2441, %v2479
        %v2503 = vadd.f32 %v2442, %v2482
        %v2504 = vadd.f32 %v2443, %v2485
        %v2505 = vadd.f32 %v2444, %v2488
        %v2506 = vadd.f32 %v2445, %v2491
        %v2507 = vadd.f32 %v2446, %v2494
        %v2508 = vadd.f32 %v2447, %v2497
        %v2509 = vadd.f32 %v2448, %v2500
        %s2510 = scalar_lea.vmem [#allocation8], 512
        %v2511 = vld [vmem:[%s2510] sm:$0xff]
        %v2512 = vld [vmem:[%s2510 + $0x8] sm:$0xff]
        %v2513 = vld [vmem:[%s2510 + $0x10] sm:$0xff]
        %v2514 = vld [vmem:[%s2510 + $0x18] sm:$0xff]
        %v2515 = vld [vmem:[%s2510 + $0x20] sm:$0xff]
        %v2516 = vld [vmem:[%s2510 + $0x28] sm:$0xff]
        %v2517 = vld [vmem:[%s2510 + $0x30] sm:$0xff]
        %v2518 = vld [vmem:[%s2510 + $0x38] sm:$0xff]
        %v2519 = vsel %vm542, %v1739, 0
        %2521 = vmatpush.msra.mxu0 0.0
        %2522 = vmatpush.msra.mxu0 0.0
        %2523 = vmatpush.msra.mxu0 0.0
        %2524 = vmatpush.msra.mxu0 0.0
        %2525 = vmatpush.msra.mxu0 0.0
        %2526 = vmatpush.msra.mxu0 0.0
        %2527 = vmatpush.msra.mxu0 0.0
        %2528 = vmatpush.msra.mxu0 0.0
        %2529 = vmatpush.msra.mxu0 %v2518
        %2530 = vmatpush.msra.mxu0 %v2517
        %2531 = vmatpush.msra.mxu0 %v2516
        %2532 = vmatpush.msra.mxu0 %v2515
        %2533 = vmatpush.msra.mxu0 %v2514
        %2534 = vmatpush.msra.mxu0 %v2513
        %2535 = vmatpush.msra.mxu0 %v2512
        %2536 = vmatpush.msra.mxu0 %v2511
        %2537 = vmatmul.f32.gmra.mxu0 %v2087
        %v2538 = vpop.f32.mrf.mxu0
        %v2539 = vadd.f32 0.0, %v2538
        %2540 = vmatmul.f32.gmra.mxu0 %v2089
        %v2541 = vpop.f32.mrf.mxu0
        %v2542 = vadd.f32 0.0, %v2541
        %2543 = vmatmul.f32.gmra.mxu0 %v2091
        %v2544 = vpop.f32.mrf.mxu0
        %v2545 = vadd.f32 0.0, %v2544
        %2546 = vmatmul.f32.gmra.mxu0 %v2093
        %v2547 = vpop.f32.mrf.mxu0
        %v2548 = vadd.f32 0.0, %v2547
        %2549 = vmatmul.f32.gmra.mxu0 %v2095
        %v2550 = vpop.f32.mrf.mxu0
        %v2551 = vadd.f32 0.0, %v2550
        %2552 = vmatmul.f32.gmra.mxu0 %v2097
        %v2553 = vpop.f32.mrf.mxu0
        %v2554 = vadd.f32 0.0, %v2553
        %2555 = vmatmul.f32.gmra.mxu0 %v2099
        %v2556 = vpop.f32.mrf.mxu0
        %v2557 = vadd.f32 0.0, %v2556
        %2558 = vmatmul.f32.gmra.mxu0 %v2519
        %v2559 = vpop.f32.mrf.mxu0
        %v2560 = vadd.f32 0.0, %v2559
        %2561 = vdwg.mxu0
        %v2562 = vadd.f32 %v2502, %v2539
        %v2563 = vadd.f32 %v2503, %v2542
        %v2564 = vadd.f32 %v2504, %v2545
        %v2565 = vadd.f32 %v2505, %v2548
        %v2566 = vadd.f32 %v2506, %v2551
        %v2567 = vadd.f32 %v2507, %v2554
        %v2568 = vadd.f32 %v2508, %v2557
        %v2569 = vadd.f32 %v2509, %v2560
        %v2570 = vld [vmem:[%s8] sm:$0x1]
        %v2572 = vperm.slane %v2570, 0
        %v2574 = vmul.f32 %v2562, %v2572
        %v2575 = vmul.f32 %v2563, %v2572
        %v2576 = vmul.f32 %v2564, %v2572
        %v2577 = vmul.f32 %v2565, %v2572
        %v2578 = vmul.f32 %v2566, %v2572
        %v2579 = vmul.f32 %v2567, %v2572
        %v2580 = vmul.f32 %v2568, %v2572
        %v2581 = vmul.f32 %v2569, %v2572
        %v2582 = vld [vmem:[%s9] sm:$0x1]
        %v2584 = vperm.slane %v2582, 0
        %v2586 = vadd.f32 %v2574, %v2584
        %v2587 = vadd.f32 %v2575, %v2584
        %v2588 = vadd.f32 %v2576, %v2584
        %v2589 = vadd.f32 %v2577, %v2584
        %v2590 = vadd.f32 %v2578, %v2584
        %v2591 = vadd.f32 %v2579, %v2584
        %v2592 = vadd.f32 %v2580, %v2584
        %v2593 = vadd.f32 %v2581, %v2584
        %v2594 = vxor.u32 %v2586, 2147483648
        %v2595 = vxor.u32 %v2587, 2147483648
        %v2596 = vxor.u32 %v2588, 2147483648
        %v2597 = vxor.u32 %v2589, 2147483648
        %v2598 = vxor.u32 %v2590, 2147483648
        %v2599 = vxor.u32 %v2591, 2147483648
        %v2600 = vxor.u32 %v2592, 2147483648
        %v2601 = vxor.u32 %v2593, 2147483648
        %v2602 = vmul.f32 %v2594, 1.442695
        %v2603 = vpow.pop %v2602
        %v2604 = vmul.f32 %v2595, 1.442695
        %v2605 = vpow.pop %v2604
        %v2606 = vmul.f32 %v2596, 1.442695
        %v2607 = vpow.pop %v2606
        %v2608 = vmul.f32 %v2597, 1.442695
        %v2609 = vpow.pop %v2608
        %v2610 = vmul.f32 %v2598, 1.442695
        %v2611 = vpow.pop %v2610
        %v2612 = vmul.f32 %v2599, 1.442695
        %v2613 = vpow.pop %v2612
        %v2614 = vmul.f32 %v2600, 1.442695
        %v2615 = vpow.pop %v2614
        %v2616 = vmul.f32 %v2601, 1.442695
        %v2617 = vpow.pop %v2616
        %v2618 = vadd.f32 %v2603, 1.0
        %v2619 = vadd.f32 %v2605, 1.0
        %v2620 = vadd.f32 %v2607, 1.0
        %v2621 = vadd.f32 %v2609, 1.0
        %v2622 = vadd.f32 %v2611, 1.0
        %v2623 = vadd.f32 %v2613, 1.0
        %v2624 = vadd.f32 %v2615, 1.0
        %v2625 = vadd.f32 %v2617, 1.0
        %v2626 = vrcp.pop %v2618
        %v2627 = vmul.f32 %v2618, %v2626
        %v2628 = vsub.f32 1.0, %v2627
        %v2629 = vmul.f32 %v2626, %v2628
        %v2630 = vadd.f32 %v2626, %v2629
        %vm2631 = vweird.f32 %v2618
        %vm2632 = vweird.f32 %v2626
        %vm2633 = vmor %vm2631, %vm2632
        %v2634 = vsel %vm2633, %v2626, %v2630
        %v2635 = vand.u32 2147483647, %v2618
        %vm2636 = vcmp.eq.f32.partialorder %v2635, 8.507059e+37
        %v2637 = vand.u32 %v2618, 2147483648
        %v2638 = vor.u32 1.1754944e-38, %v2637
        %v2639 = vsel %vm2636, %v2638, %v2634
        %v2640 = vmul.f32 1.0, %v2639
        %v2641 = vrcp.pop %v2619
        %v2642 = vmul.f32 %v2619, %v2641
        %v2643 = vsub.f32 1.0, %v2642
        %v2644 = vmul.f32 %v2641, %v2643
        %v2645 = vadd.f32 %v2641, %v2644
        %vm2646 = vweird.f32 %v2619
        %vm2647 = vweird.f32 %v2641
        %vm2648 = vmor %vm2646, %vm2647
        %v2649 = vsel %vm2648, %v2641, %v2645
        %v2650 = vand.u32 2147483647, %v2619
        %vm2651 = vcmp.eq.f32.partialorder %v2650, 8.507059e+37
        %v2652 = vand.u32 %v2619, 2147483648
        %v2653 = vor.u32 1.1754944e-38, %v2652
        %v2654 = vsel %vm2651, %v2653, %v2649
        %v2655 = vmul.f32 1.0, %v2654
        %v2656 = vrcp.pop %v2620
        %v2657 = vmul.f32 %v2620, %v2656
        %v2658 = vsub.f32 1.0, %v2657
        %v2659 = vmul.f32 %v2656, %v2658
        %v2660 = vadd.f32 %v2656, %v2659
        %vm2661 = vweird.f32 %v2620
        %vm2662 = vweird.f32 %v2656
        %vm2663 = vmor %vm2661, %vm2662
        %v2664 = vsel %vm2663, %v2656, %v2660
        %v2665 = vand.u32 2147483647, %v2620
        %vm2666 = vcmp.eq.f32.partialorder %v2665, 8.507059e+37
        %v2667 = vand.u32 %v2620, 2147483648
        %v2668 = vor.u32 1.1754944e-38, %v2667
        %v2669 = vsel %vm2666, %v2668, %v2664
        %v2670 = vmul.f32 1.0, %v2669
        %v2671 = vrcp.pop %v2621
        %v2672 = vmul.f32 %v2621, %v2671
        %v2673 = vsub.f32 1.0, %v2672
        %v2674 = vmul.f32 %v2671, %v2673
        %v2675 = vadd.f32 %v2671, %v2674
        %vm2676 = vweird.f32 %v2621
        %vm2677 = vweird.f32 %v2671
        %vm2678 = vmor %vm2676, %vm2677
        %v2679 = vsel %vm2678, %v2671, %v2675
        %v2680 = vand.u32 2147483647, %v2621
        %vm2681 = vcmp.eq.f32.partialorder %v2680, 8.507059e+37
        %v2682 = vand.u32 %v2621, 2147483648
        %v2683 = vor.u32 1.1754944e-38, %v2682
        %v2684 = vsel %vm2681, %v2683, %v2679
        %v2685 = vmul.f32 1.0, %v2684
        %v2686 = vrcp.pop %v2622
        %v2687 = vmul.f32 %v2622, %v2686
        %v2688 = vsub.f32 1.0, %v2687
        %v2689 = vmul.f32 %v2686, %v2688
        %v2690 = vadd.f32 %v2686, %v2689
        %vm2691 = vweird.f32 %v2622
        %vm2692 = vweird.f32 %v2686
        %vm2693 = vmor %vm2691, %vm2692
        %v2694 = vsel %vm2693, %v2686, %v2690
        %v2695 = vand.u32 2147483647, %v2622
        %vm2696 = vcmp.eq.f32.partialorder %v2695, 8.507059e+37
        %v2697 = vand.u32 %v2622, 2147483648
        %v2698 = vor.u32 1.1754944e-38, %v2697
        %v2699 = vsel %vm2696, %v2698, %v2694
        %v2700 = vmul.f32 1.0, %v2699
        %v2701 = vrcp.pop %v2623
        %v2702 = vmul.f32 %v2623, %v2701
        %v2703 = vsub.f32 1.0, %v2702
        %v2704 = vmul.f32 %v2701, %v2703
        %v2705 = vadd.f32 %v2701, %v2704
        %vm2706 = vweird.f32 %v2623
        %vm2707 = vweird.f32 %v2701
        %vm2708 = vmor %vm2706, %vm2707
        %v2709 = vsel %vm2708, %v2701, %v2705
        %v2710 = vand.u32 2147483647, %v2623
        %vm2711 = vcmp.eq.f32.partialorder %v2710, 8.507059e+37
        %v2712 = vand.u32 %v2623, 2147483648
        %v2713 = vor.u32 1.1754944e-38, %v2712
        %v2714 = vsel %vm2711, %v2713, %v2709
        %v2715 = vmul.f32 1.0, %v2714
        %v2716 = vrcp.pop %v2624
        %v2717 = vmul.f32 %v2624, %v2716
        %v2718 = vsub.f32 1.0, %v2717
        %v2719 = vmul.f32 %v2716, %v2718
        %v2720 = vadd.f32 %v2716, %v2719
        %vm2721 = vweird.f32 %v2624
        %vm2722 = vweird.f32 %v2716
        %vm2723 = vmor %vm2721, %vm2722
        %v2724 = vsel %vm2723, %v2716, %v2720
        %v2725 = vand.u32 2147483647, %v2624
        %vm2726 = vcmp.eq.f32.partialorder %v2725, 8.507059e+37
        %v2727 = vand.u32 %v2624, 2147483648
        %v2728 = vor.u32 1.1754944e-38, %v2727
        %v2729 = vsel %vm2726, %v2728, %v2724
        %v2730 = vmul.f32 1.0, %v2729
        %v2731 = vrcp.pop %v2625
        %v2732 = vmul.f32 %v2625, %v2731
        %v2733 = vsub.f32 1.0, %v2732
        %v2734 = vmul.f32 %v2731, %v2733
        %v2735 = vadd.f32 %v2731, %v2734
        %vm2736 = vweird.f32 %v2625
        %vm2737 = vweird.f32 %v2731
        %vm2738 = vmor %vm2736, %vm2737
        %v2739 = vsel %vm2738, %v2731, %v2735
        %v2740 = vand.u32 2147483647, %v2625
        %vm2741 = vcmp.eq.f32.partialorder %v2740, 8.507059e+37
        %v2742 = vand.u32 %v2625, 2147483648
        %v2743 = vor.u32 1.1754944e-38, %v2742
        %v2744 = vsel %vm2741, %v2743, %v2739
        %v2745 = vmul.f32 1.0, %v2744
        %v2746 = vmul.f32 %v2586, %v2640
        %v2747 = vmul.f32 %v2587, %v2655
        %v2748 = vmul.f32 %v2588, %v2670
        %v2749 = vmul.f32 %v2589, %v2685
        %v2750 = vmul.f32 %v2590, %v2700
        %v2751 = vmul.f32 %v2591, %v2715
        %v2752 = vmul.f32 %v2592, %v2730
        %v2753 = vmul.f32 %v2593, %v2745
        %2762 = vrot.lane.b32.xlu0 %v2746, 64
        %v2763 = vpop.permute.xlu0 %2762
        %2764 = vrot.lane.b32.xlu0 %v2747, 64
        %v2765 = vpop.permute.xlu0 %2764
        %2766 = vrot.lane.b32.xlu0 %v2748, 64
        %v2767 = vpop.permute.xlu0 %2766
        %2768 = vrot.lane.b32.xlu0 %v2749, 64
        %v2769 = vpop.permute.xlu0 %2768
        %2770 = vrot.lane.b32.xlu0 %v2750, 64
        %v2771 = vpop.permute.xlu0 %2770
        %2772 = vrot.lane.b32.xlu0 %v2751, 64
        %v2773 = vpop.permute.xlu0 %2772
        %2774 = vrot.lane.b32.xlu0 %v2752, 64
        %v2775 = vpop.permute.xlu0 %2774
        %2776 = vrot.lane.b32.xlu0 %v2753, 64
        %v2777 = vpop.permute.xlu0 %2776
        %v2786 = vsel %vm542, %v784, %v2763
        %v2787 = vsel %vm542, %v785, %v2765
        %v2788 = vsel %vm542, %v786, %v2767
        %v2789 = vsel %vm542, %v787, %v2769
        %v2790 = vsel %vm542, %v788, %v2771
        %v2791 = vsel %vm542, %v789, %v2773
        %v2792 = vsel %vm542, %v790, %v2775
        %v2793 = vsel %vm542, %v791, %v2777
        %2794 = vst [vmem:[%s429] sm:$0xff] %v2786
        %2795 = vst [vmem:[%s429 + $0x8] sm:$0xff] %v2787
        %2796 = vst [vmem:[%s429 + $0x10] sm:$0xff] %v2788
        %2797 = vst [vmem:[%s429 + $0x18] sm:$0xff] %v2789
        %2798 = vst [vmem:[%s429 + $0x20] sm:$0xff] %v2790
        %2799 = vst [vmem:[%s429 + $0x28] sm:$0xff] %v2791
        %2800 = vst [vmem:[%s429 + $0x30] sm:$0xff] %v2792
        %2801 = vst [vmem:[%s429 + $0x38] sm:$0xff] %v2793
        %s2802 = sand.u32 %s252, 1
        %s2803 = scalar_lea.sflag [#allocation4], %s2802
        %s2804 = sand.u32 %s252, 1
        %s2805 = smul.addr %s2804, 64
        %s2806 = scalar_lea.vmem [#allocation10], %s2805
        // Predicated region
        $region77: #{tpu_custom_call.1} parent=59 // pred_check
          %p2807 = pneg %p262
        $region78: #{tpu_custom_call.1} parent=59 // pred_check_branch
          %2809 = sbr.rel (%p2807) target = $region80
        $region79: #{tpu_custom_call.1} parent=59 // pred_region
          %2811 = vsyncadd %s2803, 0
          %s2812 = smul.addr %s29, 8
          %s2813 = smul.addr %s2812, 8
          %s2814 = scalar_lea.hbm %s10, %s2813
          %s2815 = sshll.u32 %s2806, 4
          %s2816 = int_to_ptr.vmem [resolvable:$true] %s2815
          %s2817 = sshll.u32 %s2814, 4
          %s2818 = int_to_ptr.hbm [resolvable:$true] %s2817
          %2823 = dma.vmem_to_hbm [thread:$0]  %s2816, 1024, %s2818, %s2803, 128, 128, 8
        $region80: #{tpu_custom_call.1} parent=59 // pred_fallthru
          _
      $region60: #{tpu_custom_call.1} parent=5 // pred_fallthru
        _
      %p2824 = scmp.le.s32.totalorder 2, %s24
      // Predicated region
      $region81: #{tpu_custom_call.1} parent=5 // pred_check
        %p2825 = pneg %p2824
      $region82: #{tpu_custom_call.1} parent=5 // pred_check_branch
        %2827 = sbr.rel (%p2825) target = $region84
      $region83: #{tpu_custom_call.1} parent=5 // pred_region
        %s2828 = ssub.s32 %s24, 2
        // Predicated region
        $region85: #{tpu_custom_call.1} parent=83 // pred_check
          %p2829 = pneg %p268
        $region86: #{tpu_custom_call.1} parent=83 // pred_check_branch
          %2831 = sbr.rel (%p2829) target = $region88
        $region87: #{tpu_custom_call.1} parent=83 // pred_region
          %s2832 = sand.u32 %s253, 1
          %s2833 = scalar_lea.sflag [#allocation4], %s2832
          %s2834 = sand.u32 %s253, 1
          %s2835 = smul.addr %s2834, 64
          %s2836 = scalar_lea.vmem [#allocation10], %s2835
          %2838 = dma.done %s2833, 1024
        $region88: #{tpu_custom_call.1} parent=83 // pred_fallthru
          _
      $region84: #{tpu_custom_call.1} parent=5 // pred_fallthru
        _
    $region6: #{tpu_custom_call.1} parent=1 // loop_footer
      %s28 = sadd.s32 1, %s24
    $region7: #{tpu_custom_call.1} parent=1 // loop_footer_branch
      %23 = sbr.rel target = $region3
    $region8: #{tpu_custom_call.1} parent=1 // loop_exit
      _
    %2839 = vsyncpa [#allocation3], 1
    %s2840 = scalar_lea.sflag [#allocation3], 1
    %2841 = vsyncpa %s2840, 1
    %2842 = vsyncpa [#allocation6], 1
    %2843 = vsyncpa [#allocation9], 1
    %2844 = vsyncpa [#allocation4], 1
    %s2845 = scalar_lea.sflag [#allocation4], 1
    %2846 = vsyncpa %s2845, 1

</llo_original>
